<compile_context>
chip_gen: v6e
topology: v6e:2x2x1
jax: 0.10.0
libtpu: 0.0.40
codegen_flags: <defaults>
</compile_context>

<pallas_src>
import functools

import jax
import jax.numpy as jnp
from jax.experimental import pallas as pl
from jax.experimental.pallas import tpu as pltpu

WIDTH = 32

# MXU input dtype for every dot (f32 accumulation, f32 bias/tanh).
MATMUL_DTYPE = jnp.bfloat16

# Row layout of the f32 "aux" slab (lane width = 2*width).
AUX_W1 = 0      # 3 layers x 8 rows: block-diag Linear(3,3) of both encoders
AUX_W3B = 24    # 8 rows: block-diag w3b (t1 -> width) of both encoders
AUX_B2 = 32
AUX_B22 = 33
AUX_B3 = 34
AUX_B32 = 35
AUX_B1 = 36     # 3 rows
AUX_BF = 40     # 4 rows: final1..final4 biases
AUX_BH1 = 44
AUX_BH2 = 45
AUX_BH3 = 46
AUX_ROWS = 48


def _mm(x, w):
    # bf16 MXU inputs, f32 accumulate (keeps the serial vmatmul count low).
    return jnp.dot(x.astype(MATMUL_DTYPE), w.astype(MATMUL_DTYPE),
                   preferred_element_type=jnp.float32)


def _vmem_spec():
    return pl.BlockSpec(memory_space=pltpu.MemorySpace.VMEM)


# ---------------------------------------------------------------------------
# Fused kernel: both encoders (block-diag interleaved) + FinalNN.
# ---------------------------------------------------------------------------
def _fused_kernel(pts_ref, enc_w_ref, fin_w_ref, aux_ref, out_ref, *,
                  n_src, n_dst, width):
    w2 = 2 * width
    aux = aux_ref[...]                                       # (48, 2w) f32

    # --- hoisted batched transformer1 chain for BOTH encoders at once
    # (src point xyz in lanes 0:3, dst point xyz in lanes 4:7).
    x = pts_ref[...]                                          # (Nmax, 8) f32
    for l in range(3):
        w1 = aux[AUX_W1 + 8 * l:AUX_W1 + 8 * l + 8, 0:8]      # (8, 8)
        b1 = aux[AUX_B1 + l:AUX_B1 + l + 1, 0:8]              # (1, 8)
        x = jnp.tanh(_mm(x, w1) + b1)
    # t1 @ w3b + b3: src -> lanes 0:w, dst -> lanes w:2w.  Stays in vregs.
    t1b = _mm(x, aux[AUX_W3B:AUX_W3B + 8, :]) + aux[AUX_B3:AUX_B3 + 1, :]

    # --- loop-invariant block-diag recurrence weights (hoisted, stay in vregs)
    w_t2 = enc_w_ref[0 * w2:1 * w2, :]
    w_t22 = enc_w_ref[1 * w2:2 * w2, :]
    w_t3a = enc_w_ref[2 * w2:3 * w2, :]
    w_t32 = enc_w_ref[3 * w2:4 * w2, :]
    b_t2 = aux[AUX_B2:AUX_B2 + 1, :]
    b_t22 = aux[AUX_B22:AUX_B22 + 1, :]
    b_t32 = aux[AUX_B32:AUX_B32 + 1, :]

    # --- both encoders advance in ONE serial chain of (1,2w)x(2w,2w) matmuls.
    h = jnp.zeros((1, w2), jnp.float32)
    n_common = min(n_src, n_dst)
    for i in range(n_common):            # static trip count -> fully unrolled
        t2 = jnp.tanh(_mm(h, w_t2) + b_t2)
        t2 = jnp.tanh(_mm(t2, w_t22) + b_t22)
        r = jnp.tanh(_mm(t2, w_t3a) + t1b[i:i + 1, :])        # static slice
        h = jnp.tanh(_mm(r, w_t32) + b_t32)

    # Tail when the two clouds have different point counts (static at trace
    # time): only the longer cloud keeps iterating, on its own diagonal block.
    if n_src != n_dst:
        lo = 0 if n_src > n_dst else width
        hi = lo + width
        ht = h[:, lo:hi]
        ws = (w_t2[lo:hi, lo:hi], w_t22[lo:hi, lo:hi],
              w_t3a[lo:hi, lo:hi], w_t32[lo:hi, lo:hi])
        bs = (b_t2[:, lo:hi], b_t22[:, lo:hi], b_t32[:, lo:hi])
        for i in range(n_common, max(n_src, n_dst)):
            t2 = jnp.tanh(_mm(ht, ws[0]) + bs[0])
            t2 = jnp.tanh(_mm(t2, ws[1]) + bs[1])
            r = jnp.tanh(_mm(t2, ws[2]) + t1b[i:i + 1, lo:hi])
            ht = jnp.tanh(_mm(r, ws[3]) + bs[2])
        h = (jnp.concatenate([ht, h[:, width:]], axis=-1) if lo == 0
             else jnp.concatenate([h[:, :width], ht], axis=-1))

    # --- FinalNN: h already IS torch.cat((src_tmp, dst_tmp)); rot/trans heads
    # are fused block-diagonally (7 serial matmuls instead of 10).
    for l in range(4):
        wf = fin_w_ref[l * w2:(l + 1) * w2, :]
        h = jnp.tanh(_mm(h, wf) + aux[AUX_BF + l:AUX_BF + l + 1, :])
    h = jnp.tanh(_mm(h, fin_w_ref[4 * w2:5 * w2, :]) + aux[AUX_BH1:AUX_BH1 + 1, :])
    h = jnp.tanh(_mm(h, fin_w_ref[5 * w2:6 * w2, :]) + aux[AUX_BH2:AUX_BH2 + 1, :])
    out = _mm(h, fin_w_ref[6 * w2:7 * w2, :]) + aux[AUX_BH3:AUX_BH3 + 1, :]
    out_ref[...] = out                    # lanes 0:3 = rot, 3:6 = trans, rest 0


def point_clouds_nn(src_pc, dst_pc, packed):
    """src_pc / dst_pc: (1, N, 3). Returns (6,) == torch.cat((rot, trans))."""
    enc_w, fin_w, aux = packed
    width = aux.shape[1] // 2
    src2d, dst2d = src_pc[0], dst_pc[0]
    n_src, n_dst = src2d.shape[0], dst2d.shape[0]
    n_max = max(n_src, n_dst)

    # Lane-pack both clouds into one array: src xyz -> lanes 0:3, dst -> 4:7.
    pts = jnp.zeros((n_max, 8), jnp.float32)
    pts = pts.at[:n_src, 0:3].set(src2d.astype(jnp.float32))
    pts = pts.at[:n_dst, 4:7].set(dst2d.astype(jnp.float32))

    kernel = functools.partial(_fused_kernel, n_src=n_src, n_dst=n_dst,
                               width=width)
    out = pl.pallas_call(
        kernel,
        out_shape=jax.ShapeDtypeStruct((1, 2 * width), jnp.float32),
        in_specs=[_vmem_spec()] * 4,
        out_specs=_vmem_spec(),
    )(pts, enc_w, fin_w, aux)
    return out[0, :6]


# ---------------------------------------------------------------------------
# Parameter init (deterministic, PyTorch-Linear-style uniform) + host packing.
# ---------------------------------------------------------------------------
def _linear_params(key, fan_in, fan_out):
    kw, kb = jax.random.split(key)
    bound = 1.0 / float(fan_in) ** 0.5
    w = jax.random.uniform(kw, (fan_in, fan_out), jnp.float32, -bound, bound)
    b = jax.random.uniform(kb, (fan_out,), jnp.float32, -bound, bound)
    return w, b


def init_encoder_params(key, width):
    keys = jax.random.split(key, 7)
    p = {"w1": [], "b1": []}
    for l in range(3):
        w, b = _linear_params(keys[l], 3, 3)
        p["w1"].append(w)
        p["b1"].append(b)
    p["w2"], p["b2"] = _linear_params(keys[3], width, width)
    p["w22"], p["b22"] = _linear_params(keys[4], width, width - 3)
    p["w3"], p["b3"] = _linear_params(keys[5], width, width)
    p["w32"], p["b32"] = _linear_params(keys[6], width, width)
    return p


def init_final_params(key, width):
    keys = jax.random.split(key, 10)
    p = {}
    for l in range(4):
        p[f"wf{l+1}"], p[f"bf{l+1}"] = _linear_params(keys[l], 2 * width, 2 * width)
    p["wr1"], p["br1"] = _linear_params(keys[4], width, width)
    p["wr2"], p["br2"] = _linear_params(keys[5], width, 5)
    p["wr3"], p["br3"] = _linear_params(keys[6], 5, 3)
    p["wt1"], p["bt1"] = _linear_params(keys[7], width, width)
    p["wt2"], p["bt2"] = _linear_params(keys[8], width, 5)
    p["wt3"], p["bt3"] = _linear_params(keys[9], 5, 3)
    return p


def _blockdiag(a, b):
    z01 = jnp.zeros((a.shape[0], b.shape[1]), jnp.float32)
    z10 = jnp.zeros((b.shape[0], a.shape[1]), jnp.float32)
    return jnp.concatenate([jnp.concatenate([a, z01], axis=1),
                            jnp.concatenate([z10, b], axis=1)], axis=0)


def pack_params(enc1, enc2, fin, width):
    """Fold cat/split, lane padding and the 2-encoder block-diag interleave
    into three flat slabs: two bf16 weight slabs + one f32 aux slab."""
    w2 = 2 * width

    def enc_fold(p):
        w22p = jnp.pad(p["w22"], ((0, 0), (0, 3)))          # out 29 -> 32 lanes
        b22p = jnp.pad(p["b22"], (0, 3))
        w3a = jnp.pad(p["w3"][:width - 3, :], ((0, 3), (0, 0)))  # t2 part
        w3b = p["w3"][width - 3:, :]                              # t1 part
        return w22p, b22p, w3a, w3b

    w22p1, b22p1, w3a1, w3b1 = enc_fold(enc1)
    w22p2, b22p2, w3a2, w3b2 = enc_fold(enc2)

    # Encoder recurrence weight slab (block-diag over the two encoders).
    enc_w = jnp.concatenate([
        _blockdiag(enc1["w2"], enc2["w2"]),
        _blockdiag(w22p1, w22p2),
        _blockdiag(w3a1, w3a2),
        _blockdiag(enc1["w32"], enc2["w32"]),
    ], axis=0).astype(MATMUL_DTYPE)                          # (8w, 2w)

    # FinalNN weight slab (final1..4 + fused rot/trans heads).
    wh1 = _blockdiag(fin["wr1"], fin["wt1"])                 # (2w, 2w)
    wh2 = jnp.zeros((w2, w2), jnp.float32)
    wh2 = wh2.at[:width, 0:5].set(fin["wr2"]).at[width:, 5:10].set(fin["wt2"])
    wh3 = jnp.zeros((w2, w2), jnp.float32)
    wh3 = wh3.at[0:5, 0:3].set(fin["wr3"]).at[5:10, 3:6].set(fin["wt3"])
    fin_w = jnp.concatenate(
        [fin["wf1"], fin["wf2"], fin["wf3"], fin["wf4"], wh1, wh2, wh3],
        axis=0).astype(MATMUL_DTYPE)                         # (14w, 2w)

    # f32 aux slab: small point-chain weights + every bias.
    aux = jnp.zeros((AUX_ROWS, w2), jnp.float32)
    for l in range(3):
        w1bd = _blockdiag(jnp.pad(enc1["w1"][l], ((0, 1), (0, 1))),
                          jnp.pad(enc2["w1"][l], ((0, 1), (0, 1))))   # (8, 8)
        aux = aux.at[AUX_W1 + 8 * l:AUX_W1 + 8 * l + 8, 0:8].set(w1bd)
        b1bd = jnp.concatenate([jnp.pad(enc1["b1"][l], (0, 1)),
                                jnp.pad(enc2["b1"][l], (0, 1))])      # (8,)
        aux = aux.at[AUX_B1 + l, 0:8].set(b1bd)
    w3b_bd = jnp.zeros((8, w2), jnp.float32)
    w3b_bd = w3b_bd.at[0:3, :width].set(w3b1).at[4:7, width:].set(w3b2)
    aux = aux.at[AUX_W3B:AUX_W3B + 8, :].set(w3b_bd)
    aux = aux.at[AUX_B2, :].set(jnp.concatenate([enc1["b2"], enc2["b2"]]))
    aux = aux.at[AUX_B22, :].set(jnp.concatenate([b22p1, b22p2]))
    aux = aux.at[AUX_B3, :].set(jnp.concatenate([enc1["b3"], enc2["b3"]]))
    aux = aux.at[AUX_B32, :].set(jnp.concatenate([enc1["b32"], enc2["b32"]]))
    for l in range(4):
        aux = aux.at[AUX_BF + l, :].set(fin[f"bf{l+1}"])
    aux = aux.at[AUX_BH1, :].set(jnp.concatenate([fin["br1"], fin["bt1"]]))
    aux = aux.at[AUX_BH2, 0:5].set(fin["br2"]).at[AUX_BH2, 5:10].set(fin["bt2"])
    aux = aux.at[AUX_BH3, 0:3].set(fin["br3"]).at[AUX_BH3, 3:6].set(fin["bt3"])

    return enc_w, fin_w, aux


# ---------------------------------------------------------------------------
# Pure-JAX reference: literal re-implementation of the PyTorch forward (eval
# mode), using the same MXU input dtype as the kernel.
# ---------------------------------------------------------------------------
def _reference_forward(src_pc, dst_pc, enc1, enc2, fin):
    width = enc1["w2"].shape[0]

    def lin(x, w, b):
        return jnp.dot(x.astype(MATMUL_DTYPE), w.astype(MATMUL_DTYPE),
                       preferred_element_type=jnp.float32) + b

    def encoder(pc, p):
        tmp = jnp.zeros((width,), jnp.float32)
        for i in range(pc.shape[0]):
            t1 = pc[i]
            for l in range(3):
                t1 = jnp.tanh(lin(t1, p["w1"][l], p["b1"][l]))
            t2 = jnp.tanh(lin(tmp, p["w2"], p["b2"]))
            t2 = jnp.tanh(lin(t2, p["w22"], p["b22"]))
            r = jnp.tanh(lin(jnp.concatenate([t2, t1]), p["w3"], p["b3"]))
            tmp = jnp.tanh(lin(r, p["w32"], p["b32"]))
        return tmp

    s = encoder(src_pc[0], enc1)
    d = encoder(dst_pc[0], enc2)
    t = jnp.concatenate([s, d])
    for l in range(4):
        t = jnp.tanh(lin(t, fin[f"wf{l+1}"], fin[f"bf{l+1}"]))
    rot, trans = t[:width], t[width:]
    rot = jnp.tanh(lin(rot, fin["wr1"], fin["br1"]))
    rot = jnp.tanh(lin(rot, fin["wr2"], fin["br2"]))
    rot = lin(rot, fin["wr3"], fin["br3"])
    trans = jnp.tanh(lin(trans, fin["wt1"], fin["bt1"]))
    trans = jnp.tanh(lin(trans, fin["wt2"], fin["bt2"]))
    trans = lin(trans, fin["wt3"], fin["bt3"])
    return jnp.concatenate([rot, trans])


if __name__ == "__main__":
    key = jax.random.PRNGKey(0)
    k_params, k_src, k_dst = jax.random.split(key, 3)

    kp = jax.random.split(k_params, 3)
    enc1 = init_encoder_params(kp[0], WIDTH)
    enc2 = init_encoder_params(kp[1], WIDTH)
    fin = init_final_params(kp[2], WIDTH)
    packed = pack_params(enc1, enc2, fin, WIDTH)

    n_src, n_dst = 8, 8
    src_pc = jax.random.normal(k_src, (1, n_src, 3), jnp.float32)
    dst_pc = jax.random.normal(k_dst, (1, n_dst, 3), jnp.float32)

    out = jax.jit(point_clouds_nn)(src_pc, dst_pc, packed)
    out = jax.block_until_ready(out)
    assert out.shape == (6,) and out.dtype == jnp.float32
    assert bool(jnp.all(jnp.isfinite(out)))

    ref = jax.jit(_reference_forward)(src_pc, dst_pc, enc1, enc2, fin)
    ref = jax.block_until_ready(ref)
    assert bool(jnp.allclose(out, ref, atol=1e-2)), (out, ref)

    print("KERNEL_OK")
</pallas_src>

<mosaic_0001>
module attributes {stable_mosaic.version = 11 : i64} {
  func.func @_fused_kernel(%arg0: memref<8x8xf32, #tpu.memory_space<vmem>>, %arg1: memref<256x64xbf16, #tpu.memory_space<vmem>>, %arg2: memref<448x64xbf16, #tpu.memory_space<vmem>>, %arg3: memref<48x64xf32, #tpu.memory_space<vmem>>, %arg4: memref<1x64xf32, #tpu.memory_space<vmem>>) attributes {dimension_semantics = [], scalar_prefetch = 0 : i64, scratch_operands = 0 : i64, tpu.core_type = #tpu.core_type<tc>} {
    %c0 = arith.constant 0 : index
    %c0_0 = arith.constant 0 : index
    %0 = vector.load %arg3[%c0, %c0_0] : memref<48x64xf32, #tpu.memory_space<vmem>>, vector<48x64xf32>
    %c0_1 = arith.constant 0 : index
    %c0_2 = arith.constant 0 : index
    %1 = vector.load %arg0[%c0_1, %c0_2] : memref<8x8xf32, #tpu.memory_space<vmem>>, vector<8x8xf32>
    %2 = vector.extract_strided_slice %0 {offsets = [0, 0], sizes = [8, 8], strides = [1, 1]} : vector<48x64xf32> to vector<8x8xf32>
    %3 = vector.extract_strided_slice %0 {offsets = [36, 0], sizes = [1, 8], strides = [1, 1]} : vector<48x64xf32> to vector<1x8xf32>
    %4 = arith.truncf %1 : vector<8x8xf32> to vector<8x8xbf16>
    %5 = arith.truncf %2 : vector<8x8xf32> to vector<8x8xbf16>
    %cst = arith.constant dense<0.000000e+00> : vector<8x8xf32>
    %6 = tpu.matmul %4, %5, %cst {dimension_numbers = #tpu.dot_dimension_numbers<[1], [0], [0], [1], [0, 0, 1, 1], [], []>} : vector<8x8xbf16>, vector<8x8xbf16>, vector<8x8xf32> -> vector<8x8xf32>
    %7 = vector.broadcast %3 : vector<1x8xf32> to vector<8x8xf32>
    %8 = arith.addf %6, %7 : vector<8x8xf32>
    %9 = math.tanh %8 : vector<8x8xf32>
    %10 = vector.extract_strided_slice %0 {offsets = [8, 0], sizes = [8, 8], strides = [1, 1]} : vector<48x64xf32> to vector<8x8xf32>
    %11 = vector.extract_strided_slice %0 {offsets = [37, 0], sizes = [1, 8], strides = [1, 1]} : vector<48x64xf32> to vector<1x8xf32>
    %12 = arith.truncf %9 : vector<8x8xf32> to vector<8x8xbf16>
    %13 = arith.truncf %10 : vector<8x8xf32> to vector<8x8xbf16>
    %cst_3 = arith.constant dense<0.000000e+00> : vector<8x8xf32>
    %14 = tpu.matmul %12, %13, %cst_3 {dimension_numbers = #tpu.dot_dimension_numbers<[1], [0], [0], [1], [0, 0, 1, 1], [], []>} : vector<8x8xbf16>, vector<8x8xbf16>, vector<8x8xf32> -> vector<8x8xf32>
    %15 = vector.broadcast %11 : vector<1x8xf32> to vector<8x8xf32>
    %16 = arith.addf %14, %15 : vector<8x8xf32>
    %17 = math.tanh %16 : vector<8x8xf32>
    %18 = vector.extract_strided_slice %0 {offsets = [16, 0], sizes = [8, 8], strides = [1, 1]} : vector<48x64xf32> to vector<8x8xf32>
    %19 = vector.extract_strided_slice %0 {offsets = [38, 0], sizes = [1, 8], strides = [1, 1]} : vector<48x64xf32> to vector<1x8xf32>
    %20 = arith.truncf %17 : vector<8x8xf32> to vector<8x8xbf16>
    %21 = arith.truncf %18 : vector<8x8xf32> to vector<8x8xbf16>
    %cst_4 = arith.constant dense<0.000000e+00> : vector<8x8xf32>
    %22 = tpu.matmul %20, %21, %cst_4 {dimension_numbers = #tpu.dot_dimension_numbers<[1], [0], [0], [1], [0, 0, 1, 1], [], []>} : vector<8x8xbf16>, vector<8x8xbf16>, vector<8x8xf32> -> vector<8x8xf32>
    %23 = vector.broadcast %19 : vector<1x8xf32> to vector<8x8xf32>
    %24 = arith.addf %22, %23 : vector<8x8xf32>
    %25 = math.tanh %24 : vector<8x8xf32>
    %26 = vector.extract_strided_slice %0 {offsets = [24, 0], sizes = [8, 64], strides = [1, 1]} : vector<48x64xf32> to vector<8x64xf32>
    %27 = arith.truncf %25 : vector<8x8xf32> to vector<8x8xbf16>
    %28 = arith.truncf %26 : vector<8x64xf32> to vector<8x64xbf16>
    %cst_5 = arith.constant dense<0.000000e+00> : vector<8x64xf32>
    %29 = tpu.matmul %27, %28, %cst_5 {dimension_numbers = #tpu.dot_dimension_numbers<[1], [0], [0], [1], [0, 0, 1, 1], [], []>} : vector<8x8xbf16>, vector<8x64xbf16>, vector<8x64xf32> -> vector<8x64xf32>
    %30 = vector.extract_strided_slice %0 {offsets = [34, 0], sizes = [1, 64], strides = [1, 1]} : vector<48x64xf32> to vector<1x64xf32>
    %31 = vector.broadcast %30 : vector<1x64xf32> to vector<8x64xf32>
    %32 = arith.addf %29, %31 : vector<8x64xf32>
    %c0_6 = arith.constant 0 : index
    %c0_7 = arith.constant 0 : index
    %33 = vector.load %arg1[%c0_6, %c0_7] : memref<256x64xbf16, #tpu.memory_space<vmem>>, vector<64x64xbf16>
    %c64 = arith.constant 64 : index
    %c0_8 = arith.constant 0 : index
    %34 = vector.load %arg1[%c64, %c0_8] : memref<256x64xbf16, #tpu.memory_space<vmem>>, vector<64x64xbf16>
    %c128 = arith.constant 128 : index
    %c0_9 = arith.constant 0 : index
    %35 = vector.load %arg1[%c128, %c0_9] : memref<256x64xbf16, #tpu.memory_space<vmem>>, vector<64x64xbf16>
    %c192 = arith.constant 192 : index
    %c0_10 = arith.constant 0 : index
    %36 = vector.load %arg1[%c192, %c0_10] : memref<256x64xbf16, #tpu.memory_space<vmem>>, vector<64x64xbf16>
    %37 = vector.extract_strided_slice %0 {offsets = [32, 0], sizes = [1, 64], strides = [1, 1]} : vector<48x64xf32> to vector<1x64xf32>
    %38 = vector.extract_strided_slice %0 {offsets = [33, 0], sizes = [1, 64], strides = [1, 1]} : vector<48x64xf32> to vector<1x64xf32>
    %39 = vector.extract_strided_slice %0 {offsets = [35, 0], sizes = [1, 64], strides = [1, 1]} : vector<48x64xf32> to vector<1x64xf32>
    %cst_11 = arith.constant 0.000000e+00 : f32
    %40 = vector.broadcast %cst_11 : f32 to vector<1x64xf32>
    %41 = arith.truncf %40 : vector<1x64xf32> to vector<1x64xbf16>
    %cst_12 = arith.constant dense<0.000000e+00> : vector<1x64xf32>
    %42 = tpu.matmul %41, %33, %cst_12 {dimension_numbers = #tpu.dot_dimension_numbers<[1], [0], [0], [1], [0, 0, 1, 1], [], []>} : vector<1x64xbf16>, vector<64x64xbf16>, vector<1x64xf32> -> vector<1x64xf32>
    %43 = arith.addf %42, %37 : vector<1x64xf32>
    %44 = math.tanh %43 : vector<1x64xf32>
    %45 = arith.truncf %44 : vector<1x64xf32> to vector<1x64xbf16>
    %cst_13 = arith.constant dense<0.000000e+00> : vector<1x64xf32>
    %46 = tpu.matmul %45, %34, %cst_13 {dimension_numbers = #tpu.dot_dimension_numbers<[1], [0], [0], [1], [0, 0, 1, 1], [], []>} : vector<1x64xbf16>, vector<64x64xbf16>, vector<1x64xf32> -> vector<1x64xf32>
    %47 = arith.addf %46, %38 : vector<1x64xf32>
    %48 = math.tanh %47 : vector<1x64xf32>
    %49 = arith.truncf %48 : vector<1x64xf32> to vector<1x64xbf16>
    %cst_14 = arith.constant dense<0.000000e+00> : vector<1x64xf32>
    %50 = tpu.matmul %49, %35, %cst_14 {dimension_numbers = #tpu.dot_dimension_numbers<[1], [0], [0], [1], [0, 0, 1, 1], [], []>} : vector<1x64xbf16>, vector<64x64xbf16>, vector<1x64xf32> -> vector<1x64xf32>
    %51 = vector.extract_strided_slice %32 {offsets = [0, 0], sizes = [1, 64], strides = [1, 1]} : vector<8x64xf32> to vector<1x64xf32>
    %52 = arith.addf %50, %51 : vector<1x64xf32>
    %53 = math.tanh %52 : vector<1x64xf32>
    %54 = arith.truncf %53 : vector<1x64xf32> to vector<1x64xbf16>
    %cst_15 = arith.constant dense<0.000000e+00> : vector<1x64xf32>
    %55 = tpu.matmul %54, %36, %cst_15 {dimension_numbers = #tpu.dot_dimension_numbers<[1], [0], [0], [1], [0, 0, 1, 1], [], []>} : vector<1x64xbf16>, vector<64x64xbf16>, vector<1x64xf32> -> vector<1x64xf32>
    %56 = arith.addf %55, %39 : vector<1x64xf32>
    %57 = math.tanh %56 : vector<1x64xf32>
    %58 = arith.truncf %57 : vector<1x64xf32> to vector<1x64xbf16>
    %cst_16 = arith.constant dense<0.000000e+00> : vector<1x64xf32>
    %59 = tpu.matmul %58, %33, %cst_16 {dimension_numbers = #tpu.dot_dimension_numbers<[1], [0], [0], [1], [0, 0, 1, 1], [], []>} : vector<1x64xbf16>, vector<64x64xbf16>, vector<1x64xf32> -> vector<1x64xf32>
    %60 = arith.addf %59, %37 : vector<1x64xf32>
    %61 = math.tanh %60 : vector<1x64xf32>
    %62 = arith.truncf %61 : vector<1x64xf32> to vector<1x64xbf16>
    %cst_17 = arith.constant dense<0.000000e+00> : vector<1x64xf32>
    %63 = tpu.matmul %62, %34, %cst_17 {dimension_numbers = #tpu.dot_dimension_numbers<[1], [0], [0], [1], [0, 0, 1, 1], [], []>} : vector<1x64xbf16>, vector<64x64xbf16>, vector<1x64xf32> -> vector<1x64xf32>
    %64 = arith.addf %63, %38 : vector<1x64xf32>
    %65 = math.tanh %64 : vector<1x64xf32>
    %66 = arith.truncf %65 : vector<1x64xf32> to vector<1x64xbf16>
    %cst_18 = arith.constant dense<0.000000e+00> : vector<1x64xf32>
    %67 = tpu.matmul %66, %35, %cst_18 {dimension_numbers = #tpu.dot_dimension_numbers<[1], [0], [0], [1], [0, 0, 1, 1], [], []>} : vector<1x64xbf16>, vector<64x64xbf16>, vector<1x64xf32> -> vector<1x64xf32>
    %68 = vector.extract_strided_slice %32 {offsets = [1, 0], sizes = [1, 64], strides = [1, 1]} : vector<8x64xf32> to vector<1x64xf32>
    %69 = arith.addf %67, %68 : vector<1x64xf32>
    %70 = math.tanh %69 : vector<1x64xf32>
    %71 = arith.truncf %70 : vector<1x64xf32> to vector<1x64xbf16>
    %cst_19 = arith.constant dense<0.000000e+00> : vector<1x64xf32>
    %72 = tpu.matmul %71, %36, %cst_19 {dimension_numbers = #tpu.dot_dimension_numbers<[1], [0], [0], [1], [0, 0, 1, 1], [], []>} : vector<1x64xbf16>, vector<64x64xbf16>, vector<1x64xf32> -> vector<1x64xf32>
    %73 = arith.addf %72, %39 : vector<1x64xf32>
    %74 = math.tanh %73 : vector<1x64xf32>
    %75 = arith.truncf %74 : vector<1x64xf32> to vector<1x64xbf16>
    %cst_20 = arith.constant dense<0.000000e+00> : vector<1x64xf32>
    %76 = tpu.matmul %75, %33, %cst_20 {dimension_numbers = #tpu.dot_dimension_numbers<[1], [0], [0], [1], [0, 0, 1, 1], [], []>} : vector<1x64xbf16>, vector<64x64xbf16>, vector<1x64xf32> -> vector<1x64xf32>
    %77 = arith.addf %76, %37 : vector<1x64xf32>
    %78 = math.tanh %77 : vector<1x64xf32>
    %79 = arith.truncf %78 : vector<1x64xf32> to vector<1x64xbf16>
    %cst_21 = arith.constant dense<0.000000e+00> : vector<1x64xf32>
    %80 = tpu.matmul %79, %34, %cst_21 {dimension_numbers = #tpu.dot_dimension_numbers<[1], [0], [0], [1], [0, 0, 1, 1], [], []>} : vector<1x64xbf16>, vector<64x64xbf16>, vector<1x64xf32> -> vector<1x64xf32>
    %81 = arith.addf %80, %38 : vector<1x64xf32>
    %82 = math.tanh %81 : vector<1x64xf32>
    %83 = arith.truncf %82 : vector<1x64xf32> to vector<1x64xbf16>
    %cst_22 = arith.constant dense<0.000000e+00> : vector<1x64xf32>
    %84 = tpu.matmul %83, %35, %cst_22 {dimension_numbers = #tpu.dot_dimension_numbers<[1], [0], [0], [1], [0, 0, 1, 1], [], []>} : vector<1x64xbf16>, vector<64x64xbf16>, vector<1x64xf32> -> vector<1x64xf32>
    %85 = vector.extract_strided_slice %32 {offsets = [2, 0], sizes = [1, 64], strides = [1, 1]} : vector<8x64xf32> to vector<1x64xf32>
    %86 = arith.addf %84, %85 : vector<1x64xf32>
    %87 = math.tanh %86 : vector<1x64xf32>
    %88 = arith.truncf %87 : vector<1x64xf32> to vector<1x64xbf16>
    %cst_23 = arith.constant dense<0.000000e+00> : vector<1x64xf32>
    %89 = tpu.matmul %88, %36, %cst_23 {dimension_numbers = #tpu.dot_dimension_numbers<[1], [0], [0], [1], [0, 0, 1, 1], [], []>} : vector<1x64xbf16>, vector<64x64xbf16>, vector<1x64xf32> -> vector<1x64xf32>
    %90 = arith.addf %89, %39 : vector<1x64xf32>
    %91 = math.tanh %90 : vector<1x64xf32>
    %92 = arith.truncf %91 : vector<1x64xf32> to vector<1x64xbf16>
    %cst_24 = arith.constant dense<0.000000e+00> : vector<1x64xf32>
    %93 = tpu.matmul %92, %33, %cst_24 {dimension_numbers = #tpu.dot_dimension_numbers<[1], [0], [0], [1], [0, 0, 1, 1], [], []>} : vector<1x64xbf16>, vector<64x64xbf16>, vector<1x64xf32> -> vector<1x64xf32>
    %94 = arith.addf %93, %37 : vector<1x64xf32>
    %95 = math.tanh %94 : vector<1x64xf32>
    %96 = arith.truncf %95 : vector<1x64xf32> to vector<1x64xbf16>
    %cst_25 = arith.constant dense<0.000000e+00> : vector<1x64xf32>
    %97 = tpu.matmul %96, %34, %cst_25 {dimension_numbers = #tpu.dot_dimension_numbers<[1], [0], [0], [1], [0, 0, 1, 1], [], []>} : vector<1x64xbf16>, vector<64x64xbf16>, vector<1x64xf32> -> vector<1x64xf32>
    %98 = arith.addf %97, %38 : vector<1x64xf32>
    %99 = math.tanh %98 : vector<1x64xf32>
    %100 = arith.truncf %99 : vector<1x64xf32> to vector<1x64xbf16>
    %cst_26 = arith.constant dense<0.000000e+00> : vector<1x64xf32>
    %101 = tpu.matmul %100, %35, %cst_26 {dimension_numbers = #tpu.dot_dimension_numbers<[1], [0], [0], [1], [0, 0, 1, 1], [], []>} : vector<1x64xbf16>, vector<64x64xbf16>, vector<1x64xf32> -> vector<1x64xf32>
    %102 = vector.extract_strided_slice %32 {offsets = [3, 0], sizes = [1, 64], strides = [1, 1]} : vector<8x64xf32> to vector<1x64xf32>
    %103 = arith.addf %101, %102 : vector<1x64xf32>
    %104 = math.tanh %103 : vector<1x64xf32>
    %105 = arith.truncf %104 : vector<1x64xf32> to vector<1x64xbf16>
    %cst_27 = arith.constant dense<0.000000e+00> : vector<1x64xf32>
    %106 = tpu.matmul %105, %36, %cst_27 {dimension_numbers = #tpu.dot_dimension_numbers<[1], [0], [0], [1], [0, 0, 1, 1], [], []>} : vector<1x64xbf16>, vector<64x64xbf16>, vector<1x64xf32> -> vector<1x64xf32>
    %107 = arith.addf %106, %39 : vector<1x64xf32>
    %108 = math.tanh %107 : vector<1x64xf32>
    %109 = arith.truncf %108 : vector<1x64xf32> to vector<1x64xbf16>
    %cst_28 = arith.constant dense<0.000000e+00> : vector<1x64xf32>
    %110 = tpu.matmul %109, %33, %cst_28 {dimension_numbers = #tpu.dot_dimension_numbers<[1], [0], [0], [1], [0, 0, 1, 1], [], []>} : vector<1x64xbf16>, vector<64x64xbf16>, vector<1x64xf32> -> vector<1x64xf32>
    %111 = arith.addf %110, %37 : vector<1x64xf32>
    %112 = math.tanh %111 : vector<1x64xf32>
    %113 = arith.truncf %112 : vector<1x64xf32> to vector<1x64xbf16>
    %cst_29 = arith.constant dense<0.000000e+00> : vector<1x64xf32>
    %114 = tpu.matmul %113, %34, %cst_29 {dimension_numbers = #tpu.dot_dimension_numbers<[1], [0], [0], [1], [0, 0, 1, 1], [], []>} : vector<1x64xbf16>, vector<64x64xbf16>, vector<1x64xf32> -> vector<1x64xf32>
    %115 = arith.addf %114, %38 : vector<1x64xf32>
    %116 = math.tanh %115 : vector<1x64xf32>
    %117 = arith.truncf %116 : vector<1x64xf32> to vector<1x64xbf16>
    %cst_30 = arith.constant dense<0.000000e+00> : vector<1x64xf32>
    %118 = tpu.matmul %117, %35, %cst_30 {dimension_numbers = #tpu.dot_dimension_numbers<[1], [0], [0], [1], [0, 0, 1, 1], [], []>} : vector<1x64xbf16>, vector<64x64xbf16>, vector<1x64xf32> -> vector<1x64xf32>
    %119 = vector.extract_strided_slice %32 {offsets = [4, 0], sizes = [1, 64], strides = [1, 1]} : vector<8x64xf32> to vector<1x64xf32>
    %120 = arith.addf %118, %119 : vector<1x64xf32>
    %121 = math.tanh %120 : vector<1x64xf32>
    %122 = arith.truncf %121 : vector<1x64xf32> to vector<1x64xbf16>
    %cst_31 = arith.constant dense<0.000000e+00> : vector<1x64xf32>
    %123 = tpu.matmul %122, %36, %cst_31 {dimension_numbers = #tpu.dot_dimension_numbers<[1], [0], [0], [1], [0, 0, 1, 1], [], []>} : vector<1x64xbf16>, vector<64x64xbf16>, vector<1x64xf32> -> vector<1x64xf32>
    %124 = arith.addf %123, %39 : vector<1x64xf32>
    %125 = math.tanh %124 : vector<1x64xf32>
    %126 = arith.truncf %125 : vector<1x64xf32> to vector<1x64xbf16>
    %cst_32 = arith.constant dense<0.000000e+00> : vector<1x64xf32>
    %127 = tpu.matmul %126, %33, %cst_32 {dimension_numbers = #tpu.dot_dimension_numbers<[1], [0], [0], [1], [0, 0, 1, 1], [], []>} : vector<1x64xbf16>, vector<64x64xbf16>, vector<1x64xf32> -> vector<1x64xf32>
    %128 = arith.addf %127, %37 : vector<1x64xf32>
    %129 = math.tanh %128 : vector<1x64xf32>
    %130 = arith.truncf %129 : vector<1x64xf32> to vector<1x64xbf16>
    %cst_33 = arith.constant dense<0.000000e+00> : vector<1x64xf32>
    %131 = tpu.matmul %130, %34, %cst_33 {dimension_numbers = #tpu.dot_dimension_numbers<[1], [0], [0], [1], [0, 0, 1, 1], [], []>} : vector<1x64xbf16>, vector<64x64xbf16>, vector<1x64xf32> -> vector<1x64xf32>
    %132 = arith.addf %131, %38 : vector<1x64xf32>
    %133 = math.tanh %132 : vector<1x64xf32>
    %134 = arith.truncf %133 : vector<1x64xf32> to vector<1x64xbf16>
    %cst_34 = arith.constant dense<0.000000e+00> : vector<1x64xf32>
    %135 = tpu.matmul %134, %35, %cst_34 {dimension_numbers = #tpu.dot_dimension_numbers<[1], [0], [0], [1], [0, 0, 1, 1], [], []>} : vector<1x64xbf16>, vector<64x64xbf16>, vector<1x64xf32> -> vector<1x64xf32>
    %136 = vector.extract_strided_slice %32 {offsets = [5, 0], sizes = [1, 64], strides = [1, 1]} : vector<8x64xf32> to vector<1x64xf32>
    %137 = arith.addf %135, %136 : vector<1x64xf32>
    %138 = math.tanh %137 : vector<1x64xf32>
    %139 = arith.truncf %138 : vector<1x64xf32> to vector<1x64xbf16>
    %cst_35 = arith.constant dense<0.000000e+00> : vector<1x64xf32>
    %140 = tpu.matmul %139, %36, %cst_35 {dimension_numbers = #tpu.dot_dimension_numbers<[1], [0], [0], [1], [0, 0, 1, 1], [], []>} : vector<1x64xbf16>, vector<64x64xbf16>, vector<1x64xf32> -> vector<1x64xf32>
    %141 = arith.addf %140, %39 : vector<1x64xf32>
    %142 = math.tanh %141 : vector<1x64xf32>
    %143 = arith.truncf %142 : vector<1x64xf32> to vector<1x64xbf16>
    %cst_36 = arith.constant dense<0.000000e+00> : vector<1x64xf32>
    %144 = tpu.matmul %143, %33, %cst_36 {dimension_numbers = #tpu.dot_dimension_numbers<[1], [0], [0], [1], [0, 0, 1, 1], [], []>} : vector<1x64xbf16>, vector<64x64xbf16>, vector<1x64xf32> -> vector<1x64xf32>
    %145 = arith.addf %144, %37 : vector<1x64xf32>
    %146 = math.tanh %145 : vector<1x64xf32>
    %147 = arith.truncf %146 : vector<1x64xf32> to vector<1x64xbf16>
    %cst_37 = arith.constant dense<0.000000e+00> : vector<1x64xf32>
    %148 = tpu.matmul %147, %34, %cst_37 {dimension_numbers = #tpu.dot_dimension_numbers<[1], [0], [0], [1], [0, 0, 1, 1], [], []>} : vector<1x64xbf16>, vector<64x64xbf16>, vector<1x64xf32> -> vector<1x64xf32>
    %149 = arith.addf %148, %38 : vector<1x64xf32>
    %150 = math.tanh %149 : vector<1x64xf32>
    %151 = arith.truncf %150 : vector<1x64xf32> to vector<1x64xbf16>
    %cst_38 = arith.constant dense<0.000000e+00> : vector<1x64xf32>
    %152 = tpu.matmul %151, %35, %cst_38 {dimension_numbers = #tpu.dot_dimension_numbers<[1], [0], [0], [1], [0, 0, 1, 1], [], []>} : vector<1x64xbf16>, vector<64x64xbf16>, vector<1x64xf32> -> vector<1x64xf32>
    %153 = vector.extract_strided_slice %32 {offsets = [6, 0], sizes = [1, 64], strides = [1, 1]} : vector<8x64xf32> to vector<1x64xf32>
    %154 = arith.addf %152, %153 : vector<1x64xf32>
    %155 = math.tanh %154 : vector<1x64xf32>
    %156 = arith.truncf %155 : vector<1x64xf32> to vector<1x64xbf16>
    %cst_39 = arith.constant dense<0.000000e+00> : vector<1x64xf32>
    %157 = tpu.matmul %156, %36, %cst_39 {dimension_numbers = #tpu.dot_dimension_numbers<[1], [0], [0], [1], [0, 0, 1, 1], [], []>} : vector<1x64xbf16>, vector<64x64xbf16>, vector<1x64xf32> -> vector<1x64xf32>
    %158 = arith.addf %157, %39 : vector<1x64xf32>
    %159 = math.tanh %158 : vector<1x64xf32>
    %160 = arith.truncf %159 : vector<1x64xf32> to vector<1x64xbf16>
    %cst_40 = arith.constant dense<0.000000e+00> : vector<1x64xf32>
    %161 = tpu.matmul %160, %33, %cst_40 {dimension_numbers = #tpu.dot_dimension_numbers<[1], [0], [0], [1], [0, 0, 1, 1], [], []>} : vector<1x64xbf16>, vector<64x64xbf16>, vector<1x64xf32> -> vector<1x64xf32>
    %162 = arith.addf %161, %37 : vector<1x64xf32>
    %163 = math.tanh %162 : vector<1x64xf32>
    %164 = arith.truncf %163 : vector<1x64xf32> to vector<1x64xbf16>
    %cst_41 = arith.constant dense<0.000000e+00> : vector<1x64xf32>
    %165 = tpu.matmul %164, %34, %cst_41 {dimension_numbers = #tpu.dot_dimension_numbers<[1], [0], [0], [1], [0, 0, 1, 1], [], []>} : vector<1x64xbf16>, vector<64x64xbf16>, vector<1x64xf32> -> vector<1x64xf32>
    %166 = arith.addf %165, %38 : vector<1x64xf32>
    %167 = math.tanh %166 : vector<1x64xf32>
    %168 = arith.truncf %167 : vector<1x64xf32> to vector<1x64xbf16>
    %cst_42 = arith.constant dense<0.000000e+00> : vector<1x64xf32>
    %169 = tpu.matmul %168, %35, %cst_42 {dimension_numbers = #tpu.dot_dimension_numbers<[1], [0], [0], [1], [0, 0, 1, 1], [], []>} : vector<1x64xbf16>, vector<64x64xbf16>, vector<1x64xf32> -> vector<1x64xf32>
    %170 = vector.extract_strided_slice %32 {offsets = [7, 0], sizes = [1, 64], strides = [1, 1]} : vector<8x64xf32> to vector<1x64xf32>
    %171 = arith.addf %169, %170 : vector<1x64xf32>
    %172 = math.tanh %171 : vector<1x64xf32>
    %173 = arith.truncf %172 : vector<1x64xf32> to vector<1x64xbf16>
    %cst_43 = arith.constant dense<0.000000e+00> : vector<1x64xf32>
    %174 = tpu.matmul %173, %36, %cst_43 {dimension_numbers = #tpu.dot_dimension_numbers<[1], [0], [0], [1], [0, 0, 1, 1], [], []>} : vector<1x64xbf16>, vector<64x64xbf16>, vector<1x64xf32> -> vector<1x64xf32>
    %175 = arith.addf %174, %39 : vector<1x64xf32>
    %176 = math.tanh %175 : vector<1x64xf32>
    %c0_44 = arith.constant 0 : index
    %c0_45 = arith.constant 0 : index
    %177 = vector.load %arg2[%c0_44, %c0_45] : memref<448x64xbf16, #tpu.memory_space<vmem>>, vector<64x64xbf16>
    %178 = arith.truncf %176 : vector<1x64xf32> to vector<1x64xbf16>
    %cst_46 = arith.constant dense<0.000000e+00> : vector<1x64xf32>
    %179 = tpu.matmul %178, %177, %cst_46 {dimension_numbers = #tpu.dot_dimension_numbers<[1], [0], [0], [1], [0, 0, 1, 1], [], []>} : vector<1x64xbf16>, vector<64x64xbf16>, vector<1x64xf32> -> vector<1x64xf32>
    %180 = vector.extract_strided_slice %0 {offsets = [40, 0], sizes = [1, 64], strides = [1, 1]} : vector<48x64xf32> to vector<1x64xf32>
    %181 = arith.addf %179, %180 : vector<1x64xf32>
    %182 = math.tanh %181 : vector<1x64xf32>
    %c64_47 = arith.constant 64 : index
    %c0_48 = arith.constant 0 : index
    %183 = vector.load %arg2[%c64_47, %c0_48] : memref<448x64xbf16, #tpu.memory_space<vmem>>, vector<64x64xbf16>
    %184 = arith.truncf %182 : vector<1x64xf32> to vector<1x64xbf16>
    %cst_49 = arith.constant dense<0.000000e+00> : vector<1x64xf32>
    %185 = tpu.matmul %184, %183, %cst_49 {dimension_numbers = #tpu.dot_dimension_numbers<[1], [0], [0], [1], [0, 0, 1, 1], [], []>} : vector<1x64xbf16>, vector<64x64xbf16>, vector<1x64xf32> -> vector<1x64xf32>
    %186 = vector.extract_strided_slice %0 {offsets = [41, 0], sizes = [1, 64], strides = [1, 1]} : vector<48x64xf32> to vector<1x64xf32>
    %187 = arith.addf %185, %186 : vector<1x64xf32>
    %188 = math.tanh %187 : vector<1x64xf32>
    %c128_50 = arith.constant 128 : index
    %c0_51 = arith.constant 0 : index
    %189 = vector.load %arg2[%c128_50, %c0_51] : memref<448x64xbf16, #tpu.memory_space<vmem>>, vector<64x64xbf16>
    %190 = arith.truncf %188 : vector<1x64xf32> to vector<1x64xbf16>
    %cst_52 = arith.constant dense<0.000000e+00> : vector<1x64xf32>
    %191 = tpu.matmul %190, %189, %cst_52 {dimension_numbers = #tpu.dot_dimension_numbers<[1], [0], [0], [1], [0, 0, 1, 1], [], []>} : vector<1x64xbf16>, vector<64x64xbf16>, vector<1x64xf32> -> vector<1x64xf32>
    %192 = vector.extract_strided_slice %0 {offsets = [42, 0], sizes = [1, 64], strides = [1, 1]} : vector<48x64xf32> to vector<1x64xf32>
    %193 = arith.addf %191, %192 : vector<1x64xf32>
    %194 = math.tanh %193 : vector<1x64xf32>
    %c192_53 = arith.constant 192 : index
    %c0_54 = arith.constant 0 : index
    %195 = vector.load %arg2[%c192_53, %c0_54] : memref<448x64xbf16, #tpu.memory_space<vmem>>, vector<64x64xbf16>
    %196 = arith.truncf %194 : vector<1x64xf32> to vector<1x64xbf16>
    %cst_55 = arith.constant dense<0.000000e+00> : vector<1x64xf32>
    %197 = tpu.matmul %196, %195, %cst_55 {dimension_numbers = #tpu.dot_dimension_numbers<[1], [0], [0], [1], [0, 0, 1, 1], [], []>} : vector<1x64xbf16>, vector<64x64xbf16>, vector<1x64xf32> -> vector<1x64xf32>
    %198 = vector.extract_strided_slice %0 {offsets = [43, 0], sizes = [1, 64], strides = [1, 1]} : vector<48x64xf32> to vector<1x64xf32>
    %199 = arith.addf %197, %198 : vector<1x64xf32>
    %200 = math.tanh %199 : vector<1x64xf32>
    %c256 = arith.constant 256 : index
    %c0_56 = arith.constant 0 : index
    %201 = vector.load %arg2[%c256, %c0_56] : memref<448x64xbf16, #tpu.memory_space<vmem>>, vector<64x64xbf16>
    %202 = arith.truncf %200 : vector<1x64xf32> to vector<1x64xbf16>
    %cst_57 = arith.constant dense<0.000000e+00> : vector<1x64xf32>
    %203 = tpu.matmul %202, %201, %cst_57 {dimension_numbers = #tpu.dot_dimension_numbers<[1], [0], [0], [1], [0, 0, 1, 1], [], []>} : vector<1x64xbf16>, vector<64x64xbf16>, vector<1x64xf32> -> vector<1x64xf32>
    %204 = vector.extract_strided_slice %0 {offsets = [44, 0], sizes = [1, 64], strides = [1, 1]} : vector<48x64xf32> to vector<1x64xf32>
    %205 = arith.addf %203, %204 : vector<1x64xf32>
    %206 = math.tanh %205 : vector<1x64xf32>
    %c320 = arith.constant 320 : index
    %c0_58 = arith.constant 0 : index
    %207 = vector.load %arg2[%c320, %c0_58] : memref<448x64xbf16, #tpu.memory_space<vmem>>, vector<64x64xbf16>
    %208 = arith.truncf %206 : vector<1x64xf32> to vector<1x64xbf16>
    %cst_59 = arith.constant dense<0.000000e+00> : vector<1x64xf32>
    %209 = tpu.matmul %208, %207, %cst_59 {dimension_numbers = #tpu.dot_dimension_numbers<[1], [0], [0], [1], [0, 0, 1, 1], [], []>} : vector<1x64xbf16>, vector<64x64xbf16>, vector<1x64xf32> -> vector<1x64xf32>
    %210 = vector.extract_strided_slice %0 {offsets = [45, 0], sizes = [1, 64], strides = [1, 1]} : vector<48x64xf32> to vector<1x64xf32>
    %211 = arith.addf %209, %210 : vector<1x64xf32>
    %212 = math.tanh %211 : vector<1x64xf32>
    %c384 = arith.constant 384 : index
    %c0_60 = arith.constant 0 : index
    %213 = vector.load %arg2[%c384, %c0_60] : memref<448x64xbf16, #tpu.memory_space<vmem>>, vector<64x64xbf16>
    %214 = arith.truncf %212 : vector<1x64xf32> to vector<1x64xbf16>
    %cst_61 = arith.constant dense<0.000000e+00> : vector<1x64xf32>
    %215 = tpu.matmul %214, %213, %cst_61 {dimension_numbers = #tpu.dot_dimension_numbers<[1], [0], [0], [1], [0, 0, 1, 1], [], []>} : vector<1x64xbf16>, vector<64x64xbf16>, vector<1x64xf32> -> vector<1x64xf32>
    %216 = vector.extract_strided_slice %0 {offsets = [46, 0], sizes = [1, 64], strides = [1, 1]} : vector<48x64xf32> to vector<1x64xf32>
    %217 = arith.addf %215, %216 : vector<1x64xf32>
    %c0_62 = arith.constant 0 : index
    %c0_63 = arith.constant 0 : index
    %218 = vector.load %arg4[%c0_62, %c0_63] : memref<1x64xf32, #tpu.memory_space<vmem>>, vector<1x64xf32>
    tpu.vector_store %arg4[%c0_62, %c0_63], %217 {strides = array<i32>} : memref<1x64xf32, #tpu.memory_space<vmem>>, vector<1x64xf32>,
    return
  }
}

</mosaic_0001>

<llo_original>
// kernel: point_clouds_nn.1
$region0: #{point_clouds_nn.1}
  #allocation0 [shape = 'u32[]', space=smem, size = 0x4, offset = 0x4, fixed_abs, tag = 'smem constant byte address 0x4 - core index']
  #allocation1 [shape = 'u32[144,128]{1,0:T(1,128)}', space=vmem, size = 0x12000, scoped, tag = 'internal scratch']
  %s0 = inlined_call_operand.vmem [shape: f32[8,8], index: 0, kind: input, shape index: {}]
  %s1 = inlined_call_operand.vmem [shape: bf16[256,64], index: 1, kind: input, shape index: {}]
  %s2 = inlined_call_operand.vmem [shape: bf16[448,64], index: 2, kind: input, shape index: {}]
  %s3 = inlined_call_operand.vmem [shape: f32[48,64], index: 3, kind: input, shape index: {}]
  %s4 = inlined_call_operand.vmem [shape: f32[1,64], index: 4, kind: output, shape index: {}]
  %s5 = sld [smem:[#allocation0]]
  $region26: #{point_clouds_nn.1} parent=0
    _
  %s7 = ssub.s32 1, %s5
  %s8 = scalar_select 0, %s7, %s5
  // Predicated region
  $region2: #{point_clouds_nn.1} parent=0 // pred_check
    _
  $region3: #{point_clouds_nn.1} parent=0 // pred_check_branch
    %10 = sbr.rel (0) target = $region5
  $region4: #{point_clouds_nn.1} parent=0 // pred_region
    _
  $region5: #{point_clouds_nn.1} parent=0 // pred_fallthru
    _
  // Predicated region
  $region6: #{point_clouds_nn.1} parent=0 // pred_check
    _
  $region7: #{point_clouds_nn.1} parent=0 // pred_check_branch
    %12 = sbr.rel (0) target = $region9
  $region8: #{point_clouds_nn.1} parent=0 // pred_region
    _
  $region9: #{point_clouds_nn.1} parent=0 // pred_fallthru
    _
  // Predicated region
  $region10: #{point_clouds_nn.1} parent=0 // pred_check
    _
  $region11: #{point_clouds_nn.1} parent=0 // pred_check_branch
    %14 = sbr.rel (0) target = $region13
  $region12: #{point_clouds_nn.1} parent=0 // pred_region
    _
  $region13: #{point_clouds_nn.1} parent=0 // pred_fallthru
    _
  // Predicated region
  $region14: #{point_clouds_nn.1} parent=0 // pred_check
    _
  $region15: #{point_clouds_nn.1} parent=0 // pred_check_branch
    %16 = sbr.rel (0) target = $region17
  $region16: #{point_clouds_nn.1} parent=0 // pred_region
    _
  $region17: #{point_clouds_nn.1} parent=0 // pred_fallthru
    _
  %v18 = vld [vmem:[%s3] sm:$0xff]
  %v19 = vld [vmem:[%s3 + $0x8] sm:$0xff]
  %v20 = vld [vmem:[%s3 + $0x10] sm:$0xff]
  %v21 = vld [vmem:[%s3 + $0x18] sm:$0xff]
  %v22 = vld [vmem:[%s3 + $0x20] sm:$0xff]
  %v23 = vld [vmem:[%s3 + $0x28] sm:$0xff]
  %v24 = vld [vmem:[%s0] sm:$0xff]
  %v25 = vpack.c.bf16 %v24, %v24
  %v26 = vpack.c.bf16 %v18, %v18
  %v27 = vlaneseq
  %v28 = vshrl.u32 %v27, 7
  %v29 = vsub.s32 4, %v28
  %v30 = vrot.slane %v22, %v29
  %vm31 = vcmask 64512
  %v33 = vsel %vm31, %v25, 0
  %vm35 = vcmask 1043456
  %v37 = vsel %vm35, %v26, 0
  %39 = vmatprep.subr.bf16.mxu0 0
  %40 = vmatpush1.bf16.msra.mxu0 0
  %41 = vmatprep.subr.bf16.mxu0 0
  %42 = vmatpush1.bf16.msra.mxu0 0
  %43 = vmatprep.subr.bf16.mxu0 0
  %44 = vmatpush1.bf16.msra.mxu0 0
  %45 = vmatprep.subr.bf16.mxu0 0
  %46 = vmatpush1.bf16.msra.mxu0 0
  %47 = vmatprep.subr.bf16.mxu0 0
  %48 = vmatpush1.bf16.msra.mxu0 0
  %49 = vmatprep.subr.bf16.mxu0 0
  %50 = vmatpush1.bf16.msra.mxu0 0
  %51 = vmatprep.subr.bf16.mxu0 0
  %52 = vmatpush1.bf16.msra.mxu0 0
  %53 = vmatprep.subr.bf16.mxu0 0
  %54 = vmatpush1.bf16.msra.mxu0 %v37
  %55 = vmatprep.subr.bf16.mxu0 0
  %56 = vmatpush2.bf16.msra.mxu0 0
  %57 = vmatprep.subr.bf16.mxu0 0
  %58 = vmatpush2.bf16.msra.mxu0 0
  %59 = vmatprep.subr.bf16.mxu0 0
  %60 = vmatpush2.bf16.msra.mxu0 0
  %61 = vmatprep.subr.bf16.mxu0 0
  %62 = vmatpush2.bf16.msra.mxu0 0
  %63 = vmatprep.subr.bf16.mxu0 0
  %64 = vmatpush2.bf16.msra.mxu0 0
  %65 = vmatprep.subr.bf16.mxu0 0
  %66 = vmatpush2.bf16.msra.mxu0 0
  %67 = vmatprep.subr.bf16.mxu0 0
  %68 = vmatpush2.bf16.msra.mxu0 0
  %69 = vmatprep.subr.bf16.mxu0 0
  %70 = vmatpush2.bf16.msra.mxu0 0
  %71 = vmatprep.mubr.bf16.mxu0 0
  %72 = vmatmul.mubr.bf16.gmra.mxu0 %v33
  %v73 = vpop.f32.mrf.mxu0
  %v74 = vadd.f32 %v30, %v73
  %v75 = vpop.f32.mrf.mxu0
  %v76 = vpop.f32.mrf.mxu0
  %v77 = vpop.f32.mrf.mxu0
  %78 = vdwg.mxu0
  %v79 = vtanh.pop %v74
  %v80 = vpack.c.bf16 %v79, %v79
  %v81 = vpack.c.bf16 %v19, %v19
  %v82 = vlaneseq
  %v83 = vshrl.u32 %v82, 7
  %v84 = vsub.s32 5, %v83
  %v85 = vrot.slane %v22, %v84
  %v87 = vsel %vm31, %v80, 0
  %v90 = vsel %vm35, %v81, 0
  %92 = vmatprep.subr.bf16.mxu0 0
  %93 = vmatpush1.bf16.msra.mxu0 0
  %94 = vmatprep.subr.bf16.mxu0 0
  %95 = vmatpush1.bf16.msra.mxu0 0
  %96 = vmatprep.subr.bf16.mxu0 0
  %97 = vmatpush1.bf16.msra.mxu0 0
  %98 = vmatprep.subr.bf16.mxu0 0
  %99 = vmatpush1.bf16.msra.mxu0 0
  %100 = vmatprep.subr.bf16.mxu0 0
  %101 = vmatpush1.bf16.msra.mxu0 0
  %102 = vmatprep.subr.bf16.mxu0 0
  %103 = vmatpush1.bf16.msra.mxu0 0
  %104 = vmatprep.subr.bf16.mxu0 0
  %105 = vmatpush1.bf16.msra.mxu0 0
  %106 = vmatprep.subr.bf16.mxu0 0
  %107 = vmatpush1.bf16.msra.mxu0 %v90
  %108 = vmatprep.subr.bf16.mxu0 0
  %109 = vmatpush2.bf16.msra.mxu0 0
  %110 = vmatprep.subr.bf16.mxu0 0
  %111 = vmatpush2.bf16.msra.mxu0 0
  %112 = vmatprep.subr.bf16.mxu0 0
  %113 = vmatpush2.bf16.msra.mxu0 0
  %114 = vmatprep.subr.bf16.mxu0 0
  %115 = vmatpush2.bf16.msra.mxu0 0
  %116 = vmatprep.subr.bf16.mxu0 0
  %117 = vmatpush2.bf16.msra.mxu0 0
  %118 = vmatprep.subr.bf16.mxu0 0
  %119 = vmatpush2.bf16.msra.mxu0 0
  %120 = vmatprep.subr.bf16.mxu0 0
  %121 = vmatpush2.bf16.msra.mxu0 0
  %122 = vmatprep.subr.bf16.mxu0 0
  %123 = vmatpush2.bf16.msra.mxu0 0
  %124 = vmatprep.mubr.bf16.mxu0 0
  %125 = vmatmul.mubr.bf16.gmra.mxu0 %v87
  %v126 = vpop.f32.mrf.mxu0
  %v127 = vadd.f32 %v85, %v126
  %v128 = vpop.f32.mrf.mxu0
  %v129 = vpop.f32.mrf.mxu0
  %v130 = vpop.f32.mrf.mxu0
  %131 = vdwg.mxu0
  %v132 = vtanh.pop %v127
  %v133 = vpack.c.bf16 %v132, %v132
  %v134 = vpack.c.bf16 %v20, %v20
  %v135 = vlaneseq
  %v136 = vshrl.u32 %v135, 7
  %v137 = vsub.s32 6, %v136
  %v138 = vrot.slane %v22, %v137
  %v140 = vsel %vm31, %v133, 0
  %v143 = vsel %vm35, %v134, 0
  %145 = vmatprep.subr.bf16.mxu0 0
  %146 = vmatpush1.bf16.msra.mxu0 0
  %147 = vmatprep.subr.bf16.mxu0 0
  %148 = vmatpush1.bf16.msra.mxu0 0
  %149 = vmatprep.subr.bf16.mxu0 0
  %150 = vmatpush1.bf16.msra.mxu0 0
  %151 = vmatprep.subr.bf16.mxu0 0
  %152 = vmatpush1.bf16.msra.mxu0 0
  %153 = vmatprep.subr.bf16.mxu0 0
  %154 = vmatpush1.bf16.msra.mxu0 0
  %155 = vmatprep.subr.bf16.mxu0 0
  %156 = vmatpush1.bf16.msra.mxu0 0
  %157 = vmatprep.subr.bf16.mxu0 0
  %158 = vmatpush1.bf16.msra.mxu0 0
  %159 = vmatprep.subr.bf16.mxu0 0
  %160 = vmatpush1.bf16.msra.mxu0 %v143
  %161 = vmatprep.subr.bf16.mxu0 0
  %162 = vmatpush2.bf16.msra.mxu0 0
  %163 = vmatprep.subr.bf16.mxu0 0
  %164 = vmatpush2.bf16.msra.mxu0 0
  %165 = vmatprep.subr.bf16.mxu0 0
  %166 = vmatpush2.bf16.msra.mxu0 0
  %167 = vmatprep.subr.bf16.mxu0 0
  %168 = vmatpush2.bf16.msra.mxu0 0
  %169 = vmatprep.subr.bf16.mxu0 0
  %170 = vmatpush2.bf16.msra.mxu0 0
  %171 = vmatprep.subr.bf16.mxu0 0
  %172 = vmatpush2.bf16.msra.mxu0 0
  %173 = vmatprep.subr.bf16.mxu0 0
  %174 = vmatpush2.bf16.msra.mxu0 0
  %175 = vmatprep.subr.bf16.mxu0 0
  %176 = vmatpush2.bf16.msra.mxu0 0
  %177 = vmatprep.mubr.bf16.mxu0 0
  %178 = vmatmul.mubr.bf16.gmra.mxu0 %v140
  %v179 = vpop.f32.mrf.mxu0
  %v180 = vadd.f32 %v138, %v179
  %v181 = vpop.f32.mrf.mxu0
  %v182 = vpop.f32.mrf.mxu0
  %v183 = vpop.f32.mrf.mxu0
  %184 = vdwg.mxu0
  %v185 = vtanh.pop %v180
  %v186 = vpack.c.bf16 %v185, %v185
  %v187 = vpack.c.bf16 %v21, %v21
  %v188 = vlaneseq
  %v189 = vshrl.u32 %v188, 7
  %v190 = vsub.s32 2, %v189
  %v191 = vrot.slane %v22, %v190
  %v193 = vsel %vm31, %v186, 0
  %v196 = vsel %vm35, %v187, 0
  %198 = vmatprep.subr.bf16.mxu0 0
  %199 = vmatpush1.bf16.msra.mxu0 0
  %200 = vmatprep.subr.bf16.mxu0 0
  %201 = vmatpush1.bf16.msra.mxu0 0
  %202 = vmatprep.subr.bf16.mxu0 0
  %203 = vmatpush1.bf16.msra.mxu0 0
  %204 = vmatprep.subr.bf16.mxu0 0
  %205 = vmatpush1.bf16.msra.mxu0 0
  %206 = vmatprep.subr.bf16.mxu0 0
  %207 = vmatpush1.bf16.msra.mxu0 0
  %208 = vmatprep.subr.bf16.mxu0 0
  %209 = vmatpush1.bf16.msra.mxu0 0
  %210 = vmatprep.subr.bf16.mxu0 0
  %211 = vmatpush1.bf16.msra.mxu0 0
  %212 = vmatprep.subr.bf16.mxu0 0
  %213 = vmatpush1.bf16.msra.mxu0 %v196
  %214 = vmatprep.subr.bf16.mxu0 0
  %215 = vmatpush2.bf16.msra.mxu0 0
  %216 = vmatprep.subr.bf16.mxu0 0
  %217 = vmatpush2.bf16.msra.mxu0 0
  %218 = vmatprep.subr.bf16.mxu0 0
  %219 = vmatpush2.bf16.msra.mxu0 0
  %220 = vmatprep.subr.bf16.mxu0 0
  %221 = vmatpush2.bf16.msra.mxu0 0
  %222 = vmatprep.subr.bf16.mxu0 0
  %223 = vmatpush2.bf16.msra.mxu0 0
  %224 = vmatprep.subr.bf16.mxu0 0
  %225 = vmatpush2.bf16.msra.mxu0 0
  %226 = vmatprep.subr.bf16.mxu0 0
  %227 = vmatpush2.bf16.msra.mxu0 0
  %228 = vmatprep.subr.bf16.mxu0 0
  %229 = vmatpush2.bf16.msra.mxu0 0
  %230 = vmatprep.mubr.bf16.mxu0 0
  %231 = vmatmul.mubr.bf16.gmra.mxu0 %v193
  %v232 = vpop.f32.mrf.mxu0
  %v233 = vadd.f32 %v191, %v232
  %v234 = vpop.f32.mrf.mxu0
  %v235 = vpop.f32.mrf.mxu0
  %v236 = vpop.f32.mrf.mxu0
  %237 = vdwg.mxu0
  %v238 = vld [vmem:[%s1] sm:$0xf]
  %v239 = vld [vmem:[%s1 + $0x4] sm:$0xf]
  %v240 = vld [vmem:[%s1 + $0x8] sm:$0xf]
  %v241 = vld [vmem:[%s1 + $0xc] sm:$0xf]
  %v242 = vld [vmem:[%s1 + $0x10] sm:$0xf]
  %v243 = vld [vmem:[%s1 + $0x14] sm:$0xf]
  %v244 = vld [vmem:[%s1 + $0x18] sm:$0xf]
  %v245 = vld [vmem:[%s1 + $0x1c] sm:$0xf]
  %v246 = vld [vmem:[%s1 + $0x20] sm:$0xf]
  %v247 = vld [vmem:[%s1 + $0x24] sm:$0xf]
  %v248 = vld [vmem:[%s1 + $0x28] sm:$0xf]
  %v249 = vld [vmem:[%s1 + $0x2c] sm:$0xf]
  %v250 = vld [vmem:[%s1 + $0x30] sm:$0xf]
  %v251 = vld [vmem:[%s1 + $0x34] sm:$0xf]
  %v252 = vld [vmem:[%s1 + $0x38] sm:$0xf]
  %v253 = vld [vmem:[%s1 + $0x3c] sm:$0xf]
  %v254 = vld [vmem:[%s1 + $0x40] sm:$0xf]
  %v255 = vld [vmem:[%s1 + $0x44] sm:$0xf]
  %v256 = vld [vmem:[%s1 + $0x48] sm:$0xf]
  %v257 = vld [vmem:[%s1 + $0x4c] sm:$0xf]
  %v258 = vld [vmem:[%s1 + $0x50] sm:$0xf]
  %v259 = vld [vmem:[%s1 + $0x54] sm:$0xf]
  %v260 = vld [vmem:[%s1 + $0x58] sm:$0xf]
  %v261 = vld [vmem:[%s1 + $0x5c] sm:$0xf]
  %v262 = vld [vmem:[%s1 + $0x60] sm:$0xf]
  %v263 = vld [vmem:[%s1 + $0x64] sm:$0xf]
  %v264 = vld [vmem:[%s1 + $0x68] sm:$0xf]
  %v265 = vld [vmem:[%s1 + $0x6c] sm:$0xf]
  %v266 = vld [vmem:[%s1 + $0x70] sm:$0xf]
  %v267 = vld [vmem:[%s1 + $0x74] sm:$0xf]
  %v268 = vld [vmem:[%s1 + $0x78] sm:$0xf]
  %v269 = vld [vmem:[%s1 + $0x7c] sm:$0xf]
  %v278 = vunpack.c.l.b16 %v238
  %v279 = vunpack.c.l.b16 %v239
  %v280 = vunpack.c.l.b16 %v240
  %v281 = vunpack.c.l.b16 %v241
  %v282 = vunpack.c.l.b16 %v242
  %v283 = vunpack.c.l.b16 %v243
  %v284 = vunpack.c.l.b16 %v244
  %v285 = vunpack.c.l.b16 %v245
  %v286 = vpack.c.b16 %v279, %v278
  %v287 = vpack.c.b16 %v281, %v280
  %v288 = vpack.c.b16 %v283, %v282
  %v289 = vpack.c.b16 %v285, %v284
  %vm294 = vcmask 523264
  %v296 = vsel %vm294, 0, 0
  %298 = vmatprep.subr.bf16.mxu0 0
  %299 = vmatpush1.bf16.msra.mxu0 0
  %300 = vmatprep.subr.bf16.mxu0 0
  %301 = vmatpush1.bf16.msra.mxu0 0
  %302 = vmatprep.subr.bf16.mxu0 0
  %303 = vmatpush1.bf16.msra.mxu0 0
  %304 = vmatprep.subr.bf16.mxu0 0
  %305 = vmatpush1.bf16.msra.mxu0 0
  %306 = vmatprep.subr.bf16.mxu0 0
  %307 = vmatpush1.bf16.msra.mxu0 %v289
  %308 = vmatprep.subr.bf16.mxu0 0
  %309 = vmatpush1.bf16.msra.mxu0 %v288
  %310 = vmatprep.subr.bf16.mxu0 0
  %311 = vmatpush1.bf16.msra.mxu0 %v287
  %312 = vmatprep.subr.bf16.mxu0 0
  %313 = vmatpush1.bf16.msra.mxu0 %v286
  %314 = vmatprep.subr.bf16.mxu0 0
  %315 = vmatpush2.bf16.msra.mxu0 0
  %316 = vmatprep.subr.bf16.mxu0 0
  %317 = vmatpush2.bf16.msra.mxu0 0
  %318 = vmatprep.subr.bf16.mxu0 0
  %319 = vmatpush2.bf16.msra.mxu0 0
  %320 = vmatprep.subr.bf16.mxu0 0
  %321 = vmatpush2.bf16.msra.mxu0 0
  %322 = vmatprep.subr.bf16.mxu0 0
  %323 = vmatpush2.bf16.msra.mxu0 0
  %324 = vmatprep.subr.bf16.mxu0 0
  %325 = vmatpush2.bf16.msra.mxu0 0
  %326 = vmatprep.subr.bf16.mxu0 0
  %327 = vmatpush2.bf16.msra.mxu0 0
  %328 = vmatprep.subr.bf16.mxu0 0
  %329 = vmatpush2.bf16.msra.mxu0 0
  %330 = vmatprep.mubr.bf16.mxu0 0
  %331 = vmatmul.mubr.bf16.gmra.mxu0 %v296
  %v332 = vpop.f32.mrf.mxu0
  %v333 = vadd.f32 %v22, %v332
  %v334 = vpop.f32.mrf.mxu0
  %v335 = vpop.f32.mrf.mxu0
  %v336 = vpop.f32.mrf.mxu0
  %337 = vdwg.mxu0
  %v338 = vtanh.pop %v333
  %v339 = vpack.c.bf16 %v338, %v338
  %v348 = vunpack.c.l.b16 %v246
  %v349 = vunpack.c.l.b16 %v247
  %v350 = vunpack.c.l.b16 %v248
  %v351 = vunpack.c.l.b16 %v249
  %v352 = vunpack.c.l.b16 %v250
  %v353 = vunpack.c.l.b16 %v251
  %v354 = vunpack.c.l.b16 %v252
  %v355 = vunpack.c.l.b16 %v253
  %v356 = vpack.c.b16 %v349, %v348
  %v357 = vpack.c.b16 %v351, %v350
  %v358 = vpack.c.b16 %v353, %v352
  %v359 = vpack.c.b16 %v355, %v354
  %v365 = vrot.slane %v22, 1
  %v368 = vsel %vm294, %v339, 0
  %370 = vmatprep.subr.bf16.mxu0 0
  %371 = vmatpush1.bf16.msra.mxu0 0
  %372 = vmatprep.subr.bf16.mxu0 0
  %373 = vmatpush1.bf16.msra.mxu0 0
  %374 = vmatprep.subr.bf16.mxu0 0
  %375 = vmatpush1.bf16.msra.mxu0 0
  %376 = vmatprep.subr.bf16.mxu0 0
  %377 = vmatpush1.bf16.msra.mxu0 0
  %378 = vmatprep.subr.bf16.mxu0 0
  %379 = vmatpush1.bf16.msra.mxu0 %v359
  %380 = vmatprep.subr.bf16.mxu0 0
  %381 = vmatpush1.bf16.msra.mxu0 %v358
  %382 = vmatprep.subr.bf16.mxu0 0
  %383 = vmatpush1.bf16.msra.mxu0 %v357
  %384 = vmatprep.subr.bf16.mxu0 0
  %385 = vmatpush1.bf16.msra.mxu0 %v356
  %386 = vmatprep.subr.bf16.mxu0 0
  %387 = vmatpush2.bf16.msra.mxu0 0
  %388 = vmatprep.subr.bf16.mxu0 0
  %389 = vmatpush2.bf16.msra.mxu0 0
  %390 = vmatprep.subr.bf16.mxu0 0
  %391 = vmatpush2.bf16.msra.mxu0 0
  %392 = vmatprep.subr.bf16.mxu0 0
  %393 = vmatpush2.bf16.msra.mxu0 0
  %394 = vmatprep.subr.bf16.mxu0 0
  %395 = vmatpush2.bf16.msra.mxu0 0
  %396 = vmatprep.subr.bf16.mxu0 0
  %397 = vmatpush2.bf16.msra.mxu0 0
  %398 = vmatprep.subr.bf16.mxu0 0
  %399 = vmatpush2.bf16.msra.mxu0 0
  %400 = vmatprep.subr.bf16.mxu0 0
  %401 = vmatpush2.bf16.msra.mxu0 0
  %402 = vmatprep.mubr.bf16.mxu0 0
  %403 = vmatmul.mubr.bf16.gmra.mxu0 %v368
  %v404 = vpop.f32.mrf.mxu0
  %v405 = vadd.f32 %v365, %v404
  %v406 = vpop.f32.mrf.mxu0
  %v407 = vpop.f32.mrf.mxu0
  %v408 = vpop.f32.mrf.mxu0
  %409 = vdwg.mxu0
  %v410 = vtanh.pop %v405
  %v411 = vpack.c.bf16 %v410, %v410
  %v420 = vunpack.c.l.b16 %v254
  %v421 = vunpack.c.l.b16 %v255
  %v422 = vunpack.c.l.b16 %v256
  %v423 = vunpack.c.l.b16 %v257
  %v424 = vunpack.c.l.b16 %v258
  %v425 = vunpack.c.l.b16 %v259
  %v426 = vunpack.c.l.b16 %v260
  %v427 = vunpack.c.l.b16 %v261
  %v428 = vpack.c.b16 %v421, %v420
  %v429 = vpack.c.b16 %v423, %v422
  %v430 = vpack.c.b16 %v425, %v424
  %v431 = vpack.c.b16 %v427, %v426
  %v437 = vsel %vm294, %v411, 0
  %439 = vmatprep.subr.bf16.mxu0 0
  %440 = vmatpush1.bf16.msra.mxu0 0
  %441 = vmatprep.subr.bf16.mxu0 0
  %442 = vmatpush1.bf16.msra.mxu0 0
  %443 = vmatprep.subr.bf16.mxu0 0
  %444 = vmatpush1.bf16.msra.mxu0 0
  %445 = vmatprep.subr.bf16.mxu0 0
  %446 = vmatpush1.bf16.msra.mxu0 0
  %447 = vmatprep.subr.bf16.mxu0 0
  %448 = vmatpush1.bf16.msra.mxu0 %v431
  %449 = vmatprep.subr.bf16.mxu0 0
  %450 = vmatpush1.bf16.msra.mxu0 %v430
  %451 = vmatprep.subr.bf16.mxu0 0
  %452 = vmatpush1.bf16.msra.mxu0 %v429
  %453 = vmatprep.subr.bf16.mxu0 0
  %454 = vmatpush1.bf16.msra.mxu0 %v428
  %455 = vmatprep.subr.bf16.mxu0 0
  %456 = vmatpush2.bf16.msra.mxu0 0
  %457 = vmatprep.subr.bf16.mxu0 0
  %458 = vmatpush2.bf16.msra.mxu0 0
  %459 = vmatprep.subr.bf16.mxu0 0
  %460 = vmatpush2.bf16.msra.mxu0 0
  %461 = vmatprep.subr.bf16.mxu0 0
  %462 = vmatpush2.bf16.msra.mxu0 0
  %463 = vmatprep.subr.bf16.mxu0 0
  %464 = vmatpush2.bf16.msra.mxu0 0
  %465 = vmatprep.subr.bf16.mxu0 0
  %466 = vmatpush2.bf16.msra.mxu0 0
  %467 = vmatprep.subr.bf16.mxu0 0
  %468 = vmatpush2.bf16.msra.mxu0 0
  %469 = vmatprep.subr.bf16.mxu0 0
  %470 = vmatpush2.bf16.msra.mxu0 0
  %471 = vmatprep.mubr.bf16.mxu0 0
  %472 = vmatmul.mubr.bf16.gmra.mxu0 %v437
  %v473 = vpop.f32.mrf.mxu0
  %v474 = vadd.f32 %v233, %v473
  %v475 = vpop.f32.mrf.mxu0
  %v476 = vpop.f32.mrf.mxu0
  %v477 = vpop.f32.mrf.mxu0
  %478 = vdwg.mxu0
  %v479 = vtanh.pop %v474
  %v480 = vpack.c.bf16 %v479, %v479
  %v489 = vunpack.c.l.b16 %v262
  %v490 = vunpack.c.l.b16 %v263
  %v491 = vunpack.c.l.b16 %v264
  %v492 = vunpack.c.l.b16 %v265
  %v493 = vunpack.c.l.b16 %v266
  %v494 = vunpack.c.l.b16 %v267
  %v495 = vunpack.c.l.b16 %v268
  %v496 = vunpack.c.l.b16 %v269
  %v497 = vpack.c.b16 %v490, %v489
  %v498 = vpack.c.b16 %v492, %v491
  %v499 = vpack.c.b16 %v494, %v493
  %v500 = vpack.c.b16 %v496, %v495
  %v505 = vrot.slane %v22, 3
  %v508 = vsel %vm294, %v480, 0
  %510 = vmatprep.subr.bf16.mxu0 0
  %511 = vmatpush1.bf16.msra.mxu0 0
  %512 = vmatprep.subr.bf16.mxu0 0
  %513 = vmatpush1.bf16.msra.mxu0 0
  %514 = vmatprep.subr.bf16.mxu0 0
  %515 = vmatpush1.bf16.msra.mxu0 0
  %516 = vmatprep.subr.bf16.mxu0 0
  %517 = vmatpush1.bf16.msra.mxu0 0
  %518 = vmatprep.subr.bf16.mxu0 0
  %519 = vmatpush1.bf16.msra.mxu0 %v500
  %520 = vmatprep.subr.bf16.mxu0 0
  %521 = vmatpush1.bf16.msra.mxu0 %v499
  %522 = vmatprep.subr.bf16.mxu0 0
  %523 = vmatpush1.bf16.msra.mxu0 %v498
  %524 = vmatprep.subr.bf16.mxu0 0
  %525 = vmatpush1.bf16.msra.mxu0 %v497
  %526 = vmatprep.subr.bf16.mxu0 0
  %527 = vmatpush2.bf16.msra.mxu0 0
  %528 = vmatprep.subr.bf16.mxu0 0
  %529 = vmatpush2.bf16.msra.mxu0 0
  %530 = vmatprep.subr.bf16.mxu0 0
  %531 = vmatpush2.bf16.msra.mxu0 0
  %532 = vmatprep.subr.bf16.mxu0 0
  %533 = vmatpush2.bf16.msra.mxu0 0
  %534 = vmatprep.subr.bf16.mxu0 0
  %535 = vmatpush2.bf16.msra.mxu0 0
  %536 = vmatprep.subr.bf16.mxu0 0
  %537 = vmatpush2.bf16.msra.mxu0 0
  %538 = vmatprep.subr.bf16.mxu0 0
  %539 = vmatpush2.bf16.msra.mxu0 0
  %540 = vmatprep.subr.bf16.mxu0 0
  %541 = vmatpush2.bf16.msra.mxu0 0
  %542 = vmatprep.mubr.bf16.mxu0 0
  %543 = vmatmul.mubr.bf16.gmra.mxu0 %v508
  %v544 = vpop.f32.mrf.mxu0
  %v545 = vadd.f32 %v505, %v544
  %v546 = vpop.f32.mrf.mxu0
  %v547 = vpop.f32.mrf.mxu0
  %v548 = vpop.f32.mrf.mxu0
  %549 = vdwg.mxu0
  %v550 = vtanh.pop %v545
  %v551 = vpack.c.bf16 %v550, %v550
  %v553 = vsel %vm294, %v551, 0
  %555 = vmatprep.subr.bf16.mxu0 0
  %556 = vmatpush1.bf16.msra.mxu0 0
  %557 = vmatprep.subr.bf16.mxu0 0
  %558 = vmatpush1.bf16.msra.mxu0 0
  %559 = vmatprep.subr.bf16.mxu0 0
  %560 = vmatpush1.bf16.msra.mxu0 0
  %561 = vmatprep.subr.bf16.mxu0 0
  %562 = vmatpush1.bf16.msra.mxu0 0
  %563 = vmatprep.subr.bf16.mxu0 0
  %564 = vmatpush1.bf16.msra.mxu0 %v289
  %565 = vmatprep.subr.bf16.mxu0 0
  %566 = vmatpush1.bf16.msra.mxu0 %v288
  %567 = vmatprep.subr.bf16.mxu0 0
  %568 = vmatpush1.bf16.msra.mxu0 %v287
  %569 = vmatprep.subr.bf16.mxu0 0
  %570 = vmatpush1.bf16.msra.mxu0 %v286
  %571 = vmatprep.subr.bf16.mxu0 0
  %572 = vmatpush2.bf16.msra.mxu0 0
  %573 = vmatprep.subr.bf16.mxu0 0
  %574 = vmatpush2.bf16.msra.mxu0 0
  %575 = vmatprep.subr.bf16.mxu0 0
  %576 = vmatpush2.bf16.msra.mxu0 0
  %577 = vmatprep.subr.bf16.mxu0 0
  %578 = vmatpush2.bf16.msra.mxu0 0
  %579 = vmatprep.subr.bf16.mxu0 0
  %580 = vmatpush2.bf16.msra.mxu0 0
  %581 = vmatprep.subr.bf16.mxu0 0
  %582 = vmatpush2.bf16.msra.mxu0 0
  %583 = vmatprep.subr.bf16.mxu0 0
  %584 = vmatpush2.bf16.msra.mxu0 0
  %585 = vmatprep.subr.bf16.mxu0 0
  %586 = vmatpush2.bf16.msra.mxu0 0
  %587 = vmatprep.mubr.bf16.mxu0 0
  %588 = vmatmul.mubr.bf16.gmra.mxu0 %v553
  %v589 = vpop.f32.mrf.mxu0
  %v590 = vadd.f32 %v22, %v589
  %v591 = vpop.f32.mrf.mxu0
  %v592 = vpop.f32.mrf.mxu0
  %v593 = vpop.f32.mrf.mxu0
  %594 = vdwg.mxu0
  %v595 = vtanh.pop %v590
  %v596 = vpack.c.bf16 %v595, %v595
  %v598 = vsel %vm294, %v596, 0
  %600 = vmatprep.subr.bf16.mxu0 0
  %601 = vmatpush1.bf16.msra.mxu0 0
  %602 = vmatprep.subr.bf16.mxu0 0
  %603 = vmatpush1.bf16.msra.mxu0 0
  %604 = vmatprep.subr.bf16.mxu0 0
  %605 = vmatpush1.bf16.msra.mxu0 0
  %606 = vmatprep.subr.bf16.mxu0 0
  %607 = vmatpush1.bf16.msra.mxu0 0
  %608 = vmatprep.subr.bf16.mxu0 0
  %609 = vmatpush1.bf16.msra.mxu0 %v359
  %610 = vmatprep.subr.bf16.mxu0 0
  %611 = vmatpush1.bf16.msra.mxu0 %v358
  %612 = vmatprep.subr.bf16.mxu0 0
  %613 = vmatpush1.bf16.msra.mxu0 %v357
  %614 = vmatprep.subr.bf16.mxu0 0
  %615 = vmatpush1.bf16.msra.mxu0 %v356
  %616 = vmatprep.subr.bf16.mxu0 0
  %617 = vmatpush2.bf16.msra.mxu0 0
  %618 = vmatprep.subr.bf16.mxu0 0
  %619 = vmatpush2.bf16.msra.mxu0 0
  %620 = vmatprep.subr.bf16.mxu0 0
  %621 = vmatpush2.bf16.msra.mxu0 0
  %622 = vmatprep.subr.bf16.mxu0 0
  %623 = vmatpush2.bf16.msra.mxu0 0
  %624 = vmatprep.subr.bf16.mxu0 0
  %625 = vmatpush2.bf16.msra.mxu0 0
  %626 = vmatprep.subr.bf16.mxu0 0
  %627 = vmatpush2.bf16.msra.mxu0 0
  %628 = vmatprep.subr.bf16.mxu0 0
  %629 = vmatpush2.bf16.msra.mxu0 0
  %630 = vmatprep.subr.bf16.mxu0 0
  %631 = vmatpush2.bf16.msra.mxu0 0
  %632 = vmatprep.mubr.bf16.mxu0 0
  %633 = vmatmul.mubr.bf16.gmra.mxu0 %v598
  %v634 = vpop.f32.mrf.mxu0
  %v635 = vadd.f32 %v365, %v634
  %v636 = vpop.f32.mrf.mxu0
  %v637 = vpop.f32.mrf.mxu0
  %v638 = vpop.f32.mrf.mxu0
  %639 = vdwg.mxu0
  %v640 = vtanh.pop %v635
  %v641 = vpack.c.bf16 %v640, %v640
  %v643 = vrot.slane %v233, 1
  %v646 = vsel %vm294, %v641, 0
  %648 = vmatprep.subr.bf16.mxu0 0
  %649 = vmatpush1.bf16.msra.mxu0 0
  %650 = vmatprep.subr.bf16.mxu0 0
  %651 = vmatpush1.bf16.msra.mxu0 0
  %652 = vmatprep.subr.bf16.mxu0 0
  %653 = vmatpush1.bf16.msra.mxu0 0
  %654 = vmatprep.subr.bf16.mxu0 0
  %655 = vmatpush1.bf16.msra.mxu0 0
  %656 = vmatprep.subr.bf16.mxu0 0
  %657 = vmatpush1.bf16.msra.mxu0 %v431
  %658 = vmatprep.subr.bf16.mxu0 0
  %659 = vmatpush1.bf16.msra.mxu0 %v430
  %660 = vmatprep.subr.bf16.mxu0 0
  %661 = vmatpush1.bf16.msra.mxu0 %v429
  %662 = vmatprep.subr.bf16.mxu0 0
  %663 = vmatpush1.bf16.msra.mxu0 %v428
  %664 = vmatprep.subr.bf16.mxu0 0
  %665 = vmatpush2.bf16.msra.mxu0 0
  %666 = vmatprep.subr.bf16.mxu0 0
  %667 = vmatpush2.bf16.msra.mxu0 0
  %668 = vmatprep.subr.bf16.mxu0 0
  %669 = vmatpush2.bf16.msra.mxu0 0
  %670 = vmatprep.subr.bf16.mxu0 0
  %671 = vmatpush2.bf16.msra.mxu0 0
  %672 = vmatprep.subr.bf16.mxu0 0
  %673 = vmatpush2.bf16.msra.mxu0 0
  %674 = vmatprep.subr.bf16.mxu0 0
  %675 = vmatpush2.bf16.msra.mxu0 0
  %676 = vmatprep.subr.bf16.mxu0 0
  %677 = vmatpush2.bf16.msra.mxu0 0
  %678 = vmatprep.subr.bf16.mxu0 0
  %679 = vmatpush2.bf16.msra.mxu0 0
  %680 = vmatprep.mubr.bf16.mxu0 0
  %681 = vmatmul.mubr.bf16.gmra.mxu0 %v646
  %v682 = vpop.f32.mrf.mxu0
  %v683 = vadd.f32 %v643, %v682
  %v684 = vpop.f32.mrf.mxu0
  %v685 = vpop.f32.mrf.mxu0
  %v686 = vpop.f32.mrf.mxu0
  %687 = vdwg.mxu0
  %v688 = vtanh.pop %v683
  %v689 = vpack.c.bf16 %v688, %v688
  %v691 = vsel %vm294, %v689, 0
  %693 = vmatprep.subr.bf16.mxu0 0
  %694 = vmatpush1.bf16.msra.mxu0 0
  %695 = vmatprep.subr.bf16.mxu0 0
  %696 = vmatpush1.bf16.msra.mxu0 0
  %697 = vmatprep.subr.bf16.mxu0 0
  %698 = vmatpush1.bf16.msra.mxu0 0
  %699 = vmatprep.subr.bf16.mxu0 0
  %700 = vmatpush1.bf16.msra.mxu0 0
  %701 = vmatprep.subr.bf16.mxu0 0
  %702 = vmatpush1.bf16.msra.mxu0 %v500
  %703 = vmatprep.subr.bf16.mxu0 0
  %704 = vmatpush1.bf16.msra.mxu0 %v499
  %705 = vmatprep.subr.bf16.mxu0 0
  %706 = vmatpush1.bf16.msra.mxu0 %v498
  %707 = vmatprep.subr.bf16.mxu0 0
  %708 = vmatpush1.bf16.msra.mxu0 %v497
  %709 = vmatprep.subr.bf16.mxu0 0
  %710 = vmatpush2.bf16.msra.mxu0 0
  %711 = vmatprep.subr.bf16.mxu0 0
  %712 = vmatpush2.bf16.msra.mxu0 0
  %713 = vmatprep.subr.bf16.mxu0 0
  %714 = vmatpush2.bf16.msra.mxu0 0
  %715 = vmatprep.subr.bf16.mxu0 0
  %716 = vmatpush2.bf16.msra.mxu0 0
  %717 = vmatprep.subr.bf16.mxu0 0
  %718 = vmatpush2.bf16.msra.mxu0 0
  %719 = vmatprep.subr.bf16.mxu0 0
  %720 = vmatpush2.bf16.msra.mxu0 0
  %721 = vmatprep.subr.bf16.mxu0 0
  %722 = vmatpush2.bf16.msra.mxu0 0
  %723 = vmatprep.subr.bf16.mxu0 0
  %724 = vmatpush2.bf16.msra.mxu0 0
  %725 = vmatprep.mubr.bf16.mxu0 0
  %726 = vmatmul.mubr.bf16.gmra.mxu0 %v691
  %v727 = vpop.f32.mrf.mxu0
  %v728 = vadd.f32 %v505, %v727
  %v729 = vpop.f32.mrf.mxu0
  %v730 = vpop.f32.mrf.mxu0
  %v731 = vpop.f32.mrf.mxu0
  %732 = vdwg.mxu0
  %v733 = vtanh.pop %v728
  %v734 = vpack.c.bf16 %v733, %v733
  %v736 = vsel %vm294, %v734, 0
  %738 = vmatprep.subr.bf16.mxu0 0
  %739 = vmatpush1.bf16.msra.mxu0 0
  %740 = vmatprep.subr.bf16.mxu0 0
  %741 = vmatpush1.bf16.msra.mxu0 0
  %742 = vmatprep.subr.bf16.mxu0 0
  %743 = vmatpush1.bf16.msra.mxu0 0
  %744 = vmatprep.subr.bf16.mxu0 0
  %745 = vmatpush1.bf16.msra.mxu0 0
  %746 = vmatprep.subr.bf16.mxu0 0
  %747 = vmatpush1.bf16.msra.mxu0 %v289
  %748 = vmatprep.subr.bf16.mxu0 0
  %749 = vmatpush1.bf16.msra.mxu0 %v288
  %750 = vmatprep.subr.bf16.mxu0 0
  %751 = vmatpush1.bf16.msra.mxu0 %v287
  %752 = vmatprep.subr.bf16.mxu0 0
  %753 = vmatpush1.bf16.msra.mxu0 %v286
  %754 = vmatprep.subr.bf16.mxu0 0
  %755 = vmatpush2.bf16.msra.mxu0 0
  %756 = vmatprep.subr.bf16.mxu0 0
  %757 = vmatpush2.bf16.msra.mxu0 0
  %758 = vmatprep.subr.bf16.mxu0 0
  %759 = vmatpush2.bf16.msra.mxu0 0
  %760 = vmatprep.subr.bf16.mxu0 0
  %761 = vmatpush2.bf16.msra.mxu0 0
  %762 = vmatprep.subr.bf16.mxu0 0
  %763 = vmatpush2.bf16.msra.mxu0 0
  %764 = vmatprep.subr.bf16.mxu0 0
  %765 = vmatpush2.bf16.msra.mxu0 0
  %766 = vmatprep.subr.bf16.mxu0 0
  %767 = vmatpush2.bf16.msra.mxu0 0
  %768 = vmatprep.subr.bf16.mxu0 0
  %769 = vmatpush2.bf16.msra.mxu0 0
  %770 = vmatprep.mubr.bf16.mxu0 0
  %771 = vmatmul.mubr.bf16.gmra.mxu0 %v736
  %v772 = vpop.f32.mrf.mxu0
  %v773 = vadd.f32 %v22, %v772
  %v774 = vpop.f32.mrf.mxu0
  %v775 = vpop.f32.mrf.mxu0
  %v776 = vpop.f32.mrf.mxu0
  %777 = vdwg.mxu0
  %v778 = vtanh.pop %v773
  %v779 = vpack.c.bf16 %v778, %v778
  %v781 = vsel %vm294, %v779, 0
  %783 = vmatprep.subr.bf16.mxu0 0
  %784 = vmatpush1.bf16.msra.mxu0 0
  %785 = vmatprep.subr.bf16.mxu0 0
  %786 = vmatpush1.bf16.msra.mxu0 0
  %787 = vmatprep.subr.bf16.mxu0 0
  %788 = vmatpush1.bf16.msra.mxu0 0
  %789 = vmatprep.subr.bf16.mxu0 0
  %790 = vmatpush1.bf16.msra.mxu0 0
  %791 = vmatprep.subr.bf16.mxu0 0
  %792 = vmatpush1.bf16.msra.mxu0 %v359
  %793 = vmatprep.subr.bf16.mxu0 0
  %794 = vmatpush1.bf16.msra.mxu0 %v358
  %795 = vmatprep.subr.bf16.mxu0 0
  %796 = vmatpush1.bf16.msra.mxu0 %v357
  %797 = vmatprep.subr.bf16.mxu0 0
  %798 = vmatpush1.bf16.msra.mxu0 %v356
  %799 = vmatprep.subr.bf16.mxu0 0
  %800 = vmatpush2.bf16.msra.mxu0 0
  %801 = vmatprep.subr.bf16.mxu0 0
  %802 = vmatpush2.bf16.msra.mxu0 0
  %803 = vmatprep.subr.bf16.mxu0 0
  %804 = vmatpush2.bf16.msra.mxu0 0
  %805 = vmatprep.subr.bf16.mxu0 0
  %806 = vmatpush2.bf16.msra.mxu0 0
  %807 = vmatprep.subr.bf16.mxu0 0
  %808 = vmatpush2.bf16.msra.mxu0 0
  %809 = vmatprep.subr.bf16.mxu0 0
  %810 = vmatpush2.bf16.msra.mxu0 0
  %811 = vmatprep.subr.bf16.mxu0 0
  %812 = vmatpush2.bf16.msra.mxu0 0
  %813 = vmatprep.subr.bf16.mxu0 0
  %814 = vmatpush2.bf16.msra.mxu0 0
  %815 = vmatprep.mubr.bf16.mxu0 0
  %816 = vmatmul.mubr.bf16.gmra.mxu0 %v781
  %v817 = vpop.f32.mrf.mxu0
  %v818 = vadd.f32 %v365, %v817
  %v819 = vpop.f32.mrf.mxu0
  %v820 = vpop.f32.mrf.mxu0
  %v821 = vpop.f32.mrf.mxu0
  %822 = vdwg.mxu0
  %v823 = vtanh.pop %v818
  %v824 = vpack.c.bf16 %v823, %v823
  %v825 = vrot.slane %v233, 2
  %v828 = vsel %vm294, %v824, 0
  %830 = vmatprep.subr.bf16.mxu0 0
  %831 = vmatpush1.bf16.msra.mxu0 0
  %832 = vmatprep.subr.bf16.mxu0 0
  %833 = vmatpush1.bf16.msra.mxu0 0
  %834 = vmatprep.subr.bf16.mxu0 0
  %835 = vmatpush1.bf16.msra.mxu0 0
  %836 = vmatprep.subr.bf16.mxu0 0
  %837 = vmatpush1.bf16.msra.mxu0 0
  %838 = vmatprep.subr.bf16.mxu0 0
  %839 = vmatpush1.bf16.msra.mxu0 %v431
  %840 = vmatprep.subr.bf16.mxu0 0
  %841 = vmatpush1.bf16.msra.mxu0 %v430
  %842 = vmatprep.subr.bf16.mxu0 0
  %843 = vmatpush1.bf16.msra.mxu0 %v429
  %844 = vmatprep.subr.bf16.mxu0 0
  %845 = vmatpush1.bf16.msra.mxu0 %v428
  %846 = vmatprep.subr.bf16.mxu0 0
  %847 = vmatpush2.bf16.msra.mxu0 0
  %848 = vmatprep.subr.bf16.mxu0 0
  %849 = vmatpush2.bf16.msra.mxu0 0
  %850 = vmatprep.subr.bf16.mxu0 0
  %851 = vmatpush2.bf16.msra.mxu0 0
  %852 = vmatprep.subr.bf16.mxu0 0
  %853 = vmatpush2.bf16.msra.mxu0 0
  %854 = vmatprep.subr.bf16.mxu0 0
  %855 = vmatpush2.bf16.msra.mxu0 0
  %856 = vmatprep.subr.bf16.mxu0 0
  %857 = vmatpush2.bf16.msra.mxu0 0
  %858 = vmatprep.subr.bf16.mxu0 0
  %859 = vmatpush2.bf16.msra.mxu0 0
  %860 = vmatprep.subr.bf16.mxu0 0
  %861 = vmatpush2.bf16.msra.mxu0 0
  %862 = vmatprep.mubr.bf16.mxu0 0
  %863 = vmatmul.mubr.bf16.gmra.mxu0 %v828
  %v864 = vpop.f32.mrf.mxu0
  %v865 = vadd.f32 %v825, %v864
  %v866 = vpop.f32.mrf.mxu0
  %v867 = vpop.f32.mrf.mxu0
  %v868 = vpop.f32.mrf.mxu0
  %869 = vdwg.mxu0
  %v870 = vtanh.pop %v865
  %v871 = vpack.c.bf16 %v870, %v870
  %v873 = vsel %vm294, %v871, 0
  %875 = vmatprep.subr.bf16.mxu0 0
  %876 = vmatpush1.bf16.msra.mxu0 0
  %877 = vmatprep.subr.bf16.mxu0 0
  %878 = vmatpush1.bf16.msra.mxu0 0
  %879 = vmatprep.subr.bf16.mxu0 0
  %880 = vmatpush1.bf16.msra.mxu0 0
  %881 = vmatprep.subr.bf16.mxu0 0
  %882 = vmatpush1.bf16.msra.mxu0 0
  %883 = vmatprep.subr.bf16.mxu0 0
  %884 = vmatpush1.bf16.msra.mxu0 %v500
  %885 = vmatprep.subr.bf16.mxu0 0
  %886 = vmatpush1.bf16.msra.mxu0 %v499
  %887 = vmatprep.subr.bf16.mxu0 0
  %888 = vmatpush1.bf16.msra.mxu0 %v498
  %889 = vmatprep.subr.bf16.mxu0 0
  %890 = vmatpush1.bf16.msra.mxu0 %v497
  %891 = vmatprep.subr.bf16.mxu0 0
  %892 = vmatpush2.bf16.msra.mxu0 0
  %893 = vmatprep.subr.bf16.mxu0 0
  %894 = vmatpush2.bf16.msra.mxu0 0
  %895 = vmatprep.subr.bf16.mxu0 0
  %896 = vmatpush2.bf16.msra.mxu0 0
  %897 = vmatprep.subr.bf16.mxu0 0
  %898 = vmatpush2.bf16.msra.mxu0 0
  %899 = vmatprep.subr.bf16.mxu0 0
  %900 = vmatpush2.bf16.msra.mxu0 0
  %901 = vmatprep.subr.bf16.mxu0 0
  %902 = vmatpush2.bf16.msra.mxu0 0
  %903 = vmatprep.subr.bf16.mxu0 0
  %904 = vmatpush2.bf16.msra.mxu0 0
  %905 = vmatprep.subr.bf16.mxu0 0
  %906 = vmatpush2.bf16.msra.mxu0 0
  %907 = vmatprep.mubr.bf16.mxu0 0
  %908 = vmatmul.mubr.bf16.gmra.mxu0 %v873
  %v909 = vpop.f32.mrf.mxu0
  %v910 = vadd.f32 %v505, %v909
  %v911 = vpop.f32.mrf.mxu0
  %v912 = vpop.f32.mrf.mxu0
  %v913 = vpop.f32.mrf.mxu0
  %914 = vdwg.mxu0
  %v915 = vtanh.pop %v910
  %v916 = vpack.c.bf16 %v915, %v915
  %v918 = vsel %vm294, %v916, 0
  %920 = vmatprep.subr.bf16.mxu0 0
  %921 = vmatpush1.bf16.msra.mxu0 0
  %922 = vmatprep.subr.bf16.mxu0 0
  %923 = vmatpush1.bf16.msra.mxu0 0
  %924 = vmatprep.subr.bf16.mxu0 0
  %925 = vmatpush1.bf16.msra.mxu0 0
  %926 = vmatprep.subr.bf16.mxu0 0
  %927 = vmatpush1.bf16.msra.mxu0 0
  %928 = vmatprep.subr.bf16.mxu0 0
  %929 = vmatpush1.bf16.msra.mxu0 %v289
  %930 = vmatprep.subr.bf16.mxu0 0
  %931 = vmatpush1.bf16.msra.mxu0 %v288
  %932 = vmatprep.subr.bf16.mxu0 0
  %933 = vmatpush1.bf16.msra.mxu0 %v287
  %934 = vmatprep.subr.bf16.mxu0 0
  %935 = vmatpush1.bf16.msra.mxu0 %v286
  %936 = vmatprep.subr.bf16.mxu0 0
  %937 = vmatpush2.bf16.msra.mxu0 0
  %938 = vmatprep.subr.bf16.mxu0 0
  %939 = vmatpush2.bf16.msra.mxu0 0
  %940 = vmatprep.subr.bf16.mxu0 0
  %941 = vmatpush2.bf16.msra.mxu0 0
  %942 = vmatprep.subr.bf16.mxu0 0
  %943 = vmatpush2.bf16.msra.mxu0 0
  %944 = vmatprep.subr.bf16.mxu0 0
  %945 = vmatpush2.bf16.msra.mxu0 0
  %946 = vmatprep.subr.bf16.mxu0 0
  %947 = vmatpush2.bf16.msra.mxu0 0
  %948 = vmatprep.subr.bf16.mxu0 0
  %949 = vmatpush2.bf16.msra.mxu0 0
  %950 = vmatprep.subr.bf16.mxu0 0
  %951 = vmatpush2.bf16.msra.mxu0 0
  %952 = vmatprep.mubr.bf16.mxu0 0
  %953 = vmatmul.mubr.bf16.gmra.mxu0 %v918
  %v954 = vpop.f32.mrf.mxu0
  %v955 = vadd.f32 %v22, %v954
  %v956 = vpop.f32.mrf.mxu0
  %v957 = vpop.f32.mrf.mxu0
  %v958 = vpop.f32.mrf.mxu0
  %959 = vdwg.mxu0
  %v960 = vtanh.pop %v955
  %v961 = vpack.c.bf16 %v960, %v960
  %v963 = vsel %vm294, %v961, 0
  %965 = vmatprep.subr.bf16.mxu0 0
  %966 = vmatpush1.bf16.msra.mxu0 0
  %967 = vmatprep.subr.bf16.mxu0 0
  %968 = vmatpush1.bf16.msra.mxu0 0
  %969 = vmatprep.subr.bf16.mxu0 0
  %970 = vmatpush1.bf16.msra.mxu0 0
  %971 = vmatprep.subr.bf16.mxu0 0
  %972 = vmatpush1.bf16.msra.mxu0 0
  %973 = vmatprep.subr.bf16.mxu0 0
  %974 = vmatpush1.bf16.msra.mxu0 %v359
  %975 = vmatprep.subr.bf16.mxu0 0
  %976 = vmatpush1.bf16.msra.mxu0 %v358
  %977 = vmatprep.subr.bf16.mxu0 0
  %978 = vmatpush1.bf16.msra.mxu0 %v357
  %979 = vmatprep.subr.bf16.mxu0 0
  %980 = vmatpush1.bf16.msra.mxu0 %v356
  %981 = vmatprep.subr.bf16.mxu0 0
  %982 = vmatpush2.bf16.msra.mxu0 0
  %983 = vmatprep.subr.bf16.mxu0 0
  %984 = vmatpush2.bf16.msra.mxu0 0
  %985 = vmatprep.subr.bf16.mxu0 0
  %986 = vmatpush2.bf16.msra.mxu0 0
  %987 = vmatprep.subr.bf16.mxu0 0
  %988 = vmatpush2.bf16.msra.mxu0 0
  %989 = vmatprep.subr.bf16.mxu0 0
  %990 = vmatpush2.bf16.msra.mxu0 0
  %991 = vmatprep.subr.bf16.mxu0 0
  %992 = vmatpush2.bf16.msra.mxu0 0
  %993 = vmatprep.subr.bf16.mxu0 0
  %994 = vmatpush2.bf16.msra.mxu0 0
  %995 = vmatprep.subr.bf16.mxu0 0
  %996 = vmatpush2.bf16.msra.mxu0 0
  %997 = vmatprep.mubr.bf16.mxu0 0
  %998 = vmatmul.mubr.bf16.gmra.mxu0 %v963
  %v999 = vpop.f32.mrf.mxu0
  %v1000 = vadd.f32 %v365, %v999
  %v1001 = vpop.f32.mrf.mxu0
  %v1002 = vpop.f32.mrf.mxu0
  %v1003 = vpop.f32.mrf.mxu0
  %1004 = vdwg.mxu0
  %v1005 = vtanh.pop %v1000
  %v1006 = vpack.c.bf16 %v1005, %v1005
  %v1007 = vrot.slane %v233, 3
  %v1010 = vsel %vm294, %v1006, 0
  %1012 = vmatprep.subr.bf16.mxu0 0
  %1013 = vmatpush1.bf16.msra.mxu0 0
  %1014 = vmatprep.subr.bf16.mxu0 0
  %1015 = vmatpush1.bf16.msra.mxu0 0
  %1016 = vmatprep.subr.bf16.mxu0 0
  %1017 = vmatpush1.bf16.msra.mxu0 0
  %1018 = vmatprep.subr.bf16.mxu0 0
  %1019 = vmatpush1.bf16.msra.mxu0 0
  %1020 = vmatprep.subr.bf16.mxu0 0
  %1021 = vmatpush1.bf16.msra.mxu0 %v431
  %1022 = vmatprep.subr.bf16.mxu0 0
  %1023 = vmatpush1.bf16.msra.mxu0 %v430
  %1024 = vmatprep.subr.bf16.mxu0 0
  %1025 = vmatpush1.bf16.msra.mxu0 %v429
  %1026 = vmatprep.subr.bf16.mxu0 0
  %1027 = vmatpush1.bf16.msra.mxu0 %v428
  %1028 = vmatprep.subr.bf16.mxu0 0
  %1029 = vmatpush2.bf16.msra.mxu0 0
  %1030 = vmatprep.subr.bf16.mxu0 0
  %1031 = vmatpush2.bf16.msra.mxu0 0
  %1032 = vmatprep.subr.bf16.mxu0 0
  %1033 = vmatpush2.bf16.msra.mxu0 0
  %1034 = vmatprep.subr.bf16.mxu0 0
  %1035 = vmatpush2.bf16.msra.mxu0 0
  %1036 = vmatprep.subr.bf16.mxu0 0
  %1037 = vmatpush2.bf16.msra.mxu0 0
  %1038 = vmatprep.subr.bf16.mxu0 0
  %1039 = vmatpush2.bf16.msra.mxu0 0
  %1040 = vmatprep.subr.bf16.mxu0 0
  %1041 = vmatpush2.bf16.msra.mxu0 0
  %1042 = vmatprep.subr.bf16.mxu0 0
  %1043 = vmatpush2.bf16.msra.mxu0 0
  %1044 = vmatprep.mubr.bf16.mxu0 0
  %1045 = vmatmul.mubr.bf16.gmra.mxu0 %v1010
  %v1046 = vpop.f32.mrf.mxu0
  %v1047 = vadd.f32 %v1007, %v1046
  %v1048 = vpop.f32.mrf.mxu0
  %v1049 = vpop.f32.mrf.mxu0
  %v1050 = vpop.f32.mrf.mxu0
  %1051 = vdwg.mxu0
  %v1052 = vtanh.pop %v1047
  %v1053 = vpack.c.bf16 %v1052, %v1052
  %v1055 = vsel %vm294, %v1053, 0
  %1057 = vmatprep.subr.bf16.mxu0 0
  %1058 = vmatpush1.bf16.msra.mxu0 0
  %1059 = vmatprep.subr.bf16.mxu0 0
  %1060 = vmatpush1.bf16.msra.mxu0 0
  %1061 = vmatprep.subr.bf16.mxu0 0
  %1062 = vmatpush1.bf16.msra.mxu0 0
  %1063 = vmatprep.subr.bf16.mxu0 0
  %1064 = vmatpush1.bf16.msra.mxu0 0
  %1065 = vmatprep.subr.bf16.mxu0 0
  %1066 = vmatpush1.bf16.msra.mxu0 %v500
  %1067 = vmatprep.subr.bf16.mxu0 0
  %1068 = vmatpush1.bf16.msra.mxu0 %v499
  %1069 = vmatprep.subr.bf16.mxu0 0
  %1070 = vmatpush1.bf16.msra.mxu0 %v498
  %1071 = vmatprep.subr.bf16.mxu0 0
  %1072 = vmatpush1.bf16.msra.mxu0 %v497
  %1073 = vmatprep.subr.bf16.mxu0 0
  %1074 = vmatpush2.bf16.msra.mxu0 0
  %1075 = vmatprep.subr.bf16.mxu0 0
  %1076 = vmatpush2.bf16.msra.mxu0 0
  %1077 = vmatprep.subr.bf16.mxu0 0
  %1078 = vmatpush2.bf16.msra.mxu0 0
  %1079 = vmatprep.subr.bf16.mxu0 0
  %1080 = vmatpush2.bf16.msra.mxu0 0
  %1081 = vmatprep.subr.bf16.mxu0 0
  %1082 = vmatpush2.bf16.msra.mxu0 0
  %1083 = vmatprep.subr.bf16.mxu0 0
  %1084 = vmatpush2.bf16.msra.mxu0 0
  %1085 = vmatprep.subr.bf16.mxu0 0
  %1086 = vmatpush2.bf16.msra.mxu0 0
  %1087 = vmatprep.subr.bf16.mxu0 0
  %1088 = vmatpush2.bf16.msra.mxu0 0
  %1089 = vmatprep.mubr.bf16.mxu0 0
  %1090 = vmatmul.mubr.bf16.gmra.mxu0 %v1055
  %v1091 = vpop.f32.mrf.mxu0
  %v1092 = vadd.f32 %v505, %v1091
  %v1093 = vpop.f32.mrf.mxu0
  %v1094 = vpop.f32.mrf.mxu0
  %v1095 = vpop.f32.mrf.mxu0
  %1096 = vdwg.mxu0
  %v1097 = vtanh.pop %v1092
  %v1098 = vpack.c.bf16 %v1097, %v1097
  %v1100 = vsel %vm294, %v1098, 0
  %1102 = vmatprep.subr.bf16.mxu0 0
  %1103 = vmatpush1.bf16.msra.mxu0 0
  %1104 = vmatprep.subr.bf16.mxu0 0
  %1105 = vmatpush1.bf16.msra.mxu0 0
  %1106 = vmatprep.subr.bf16.mxu0 0
  %1107 = vmatpush1.bf16.msra.mxu0 0
  %1108 = vmatprep.subr.bf16.mxu0 0
  %1109 = vmatpush1.bf16.msra.mxu0 0
  %1110 = vmatprep.subr.bf16.mxu0 0
  %1111 = vmatpush1.bf16.msra.mxu0 %v289
  %1112 = vmatprep.subr.bf16.mxu0 0
  %1113 = vmatpush1.bf16.msra.mxu0 %v288
  %1114 = vmatprep.subr.bf16.mxu0 0
  %1115 = vmatpush1.bf16.msra.mxu0 %v287
  %1116 = vmatprep.subr.bf16.mxu0 0
  %1117 = vmatpush1.bf16.msra.mxu0 %v286
  %1118 = vmatprep.subr.bf16.mxu0 0
  %1119 = vmatpush2.bf16.msra.mxu0 0
  %1120 = vmatprep.subr.bf16.mxu0 0
  %1121 = vmatpush2.bf16.msra.mxu0 0
  %1122 = vmatprep.subr.bf16.mxu0 0
  %1123 = vmatpush2.bf16.msra.mxu0 0
  %1124 = vmatprep.subr.bf16.mxu0 0
  %1125 = vmatpush2.bf16.msra.mxu0 0
  %1126 = vmatprep.subr.bf16.mxu0 0
  %1127 = vmatpush2.bf16.msra.mxu0 0
  %1128 = vmatprep.subr.bf16.mxu0 0
  %1129 = vmatpush2.bf16.msra.mxu0 0
  %1130 = vmatprep.subr.bf16.mxu0 0
  %1131 = vmatpush2.bf16.msra.mxu0 0
  %1132 = vmatprep.subr.bf16.mxu0 0
  %1133 = vmatpush2.bf16.msra.mxu0 0
  %1134 = vmatprep.mubr.bf16.mxu0 0
  %1135 = vmatmul.mubr.bf16.gmra.mxu0 %v1100
  %v1136 = vpop.f32.mrf.mxu0
  %v1137 = vadd.f32 %v22, %v1136
  %v1138 = vpop.f32.mrf.mxu0
  %v1139 = vpop.f32.mrf.mxu0
  %v1140 = vpop.f32.mrf.mxu0
  %1141 = vdwg.mxu0
  %v1142 = vtanh.pop %v1137
  %v1143 = vpack.c.bf16 %v1142, %v1142
  %v1145 = vsel %vm294, %v1143, 0
  %1147 = vmatprep.subr.bf16.mxu0 0
  %1148 = vmatpush1.bf16.msra.mxu0 0
  %1149 = vmatprep.subr.bf16.mxu0 0
  %1150 = vmatpush1.bf16.msra.mxu0 0
  %1151 = vmatprep.subr.bf16.mxu0 0
  %1152 = vmatpush1.bf16.msra.mxu0 0
  %1153 = vmatprep.subr.bf16.mxu0 0
  %1154 = vmatpush1.bf16.msra.mxu0 0
  %1155 = vmatprep.subr.bf16.mxu0 0
  %1156 = vmatpush1.bf16.msra.mxu0 %v359
  %1157 = vmatprep.subr.bf16.mxu0 0
  %1158 = vmatpush1.bf16.msra.mxu0 %v358
  %1159 = vmatprep.subr.bf16.mxu0 0
  %1160 = vmatpush1.bf16.msra.mxu0 %v357
  %1161 = vmatprep.subr.bf16.mxu0 0
  %1162 = vmatpush1.bf16.msra.mxu0 %v356
  %1163 = vmatprep.subr.bf16.mxu0 0
  %1164 = vmatpush2.bf16.msra.mxu0 0
  %1165 = vmatprep.subr.bf16.mxu0 0
  %1166 = vmatpush2.bf16.msra.mxu0 0
  %1167 = vmatprep.subr.bf16.mxu0 0
  %1168 = vmatpush2.bf16.msra.mxu0 0
  %1169 = vmatprep.subr.bf16.mxu0 0
  %1170 = vmatpush2.bf16.msra.mxu0 0
  %1171 = vmatprep.subr.bf16.mxu0 0
  %1172 = vmatpush2.bf16.msra.mxu0 0
  %1173 = vmatprep.subr.bf16.mxu0 0
  %1174 = vmatpush2.bf16.msra.mxu0 0
  %1175 = vmatprep.subr.bf16.mxu0 0
  %1176 = vmatpush2.bf16.msra.mxu0 0
  %1177 = vmatprep.subr.bf16.mxu0 0
  %1178 = vmatpush2.bf16.msra.mxu0 0
  %1179 = vmatprep.mubr.bf16.mxu0 0
  %1180 = vmatmul.mubr.bf16.gmra.mxu0 %v1145
  %v1181 = vpop.f32.mrf.mxu0
  %v1182 = vadd.f32 %v365, %v1181
  %v1183 = vpop.f32.mrf.mxu0
  %v1184 = vpop.f32.mrf.mxu0
  %v1185 = vpop.f32.mrf.mxu0
  %1186 = vdwg.mxu0
  %v1187 = vtanh.pop %v1182
  %v1188 = vpack.c.bf16 %v1187, %v1187
  %v1189 = vrot.slane %v233, 4
  %v1192 = vsel %vm294, %v1188, 0
  %1194 = vmatprep.subr.bf16.mxu0 0
  %1195 = vmatpush1.bf16.msra.mxu0 0
  %1196 = vmatprep.subr.bf16.mxu0 0
  %1197 = vmatpush1.bf16.msra.mxu0 0
  %1198 = vmatprep.subr.bf16.mxu0 0
  %1199 = vmatpush1.bf16.msra.mxu0 0
  %1200 = vmatprep.subr.bf16.mxu0 0
  %1201 = vmatpush1.bf16.msra.mxu0 0
  %1202 = vmatprep.subr.bf16.mxu0 0
  %1203 = vmatpush1.bf16.msra.mxu0 %v431
  %1204 = vmatprep.subr.bf16.mxu0 0
  %1205 = vmatpush1.bf16.msra.mxu0 %v430
  %1206 = vmatprep.subr.bf16.mxu0 0
  %1207 = vmatpush1.bf16.msra.mxu0 %v429
  %1208 = vmatprep.subr.bf16.mxu0 0
  %1209 = vmatpush1.bf16.msra.mxu0 %v428
  %1210 = vmatprep.subr.bf16.mxu0 0
  %1211 = vmatpush2.bf16.msra.mxu0 0
  %1212 = vmatprep.subr.bf16.mxu0 0
  %1213 = vmatpush2.bf16.msra.mxu0 0
  %1214 = vmatprep.subr.bf16.mxu0 0
  %1215 = vmatpush2.bf16.msra.mxu0 0
  %1216 = vmatprep.subr.bf16.mxu0 0
  %1217 = vmatpush2.bf16.msra.mxu0 0
  %1218 = vmatprep.subr.bf16.mxu0 0
  %1219 = vmatpush2.bf16.msra.mxu0 0
  %1220 = vmatprep.subr.bf16.mxu0 0
  %1221 = vmatpush2.bf16.msra.mxu0 0
  %1222 = vmatprep.subr.bf16.mxu0 0
  %1223 = vmatpush2.bf16.msra.mxu0 0
  %1224 = vmatprep.subr.bf16.mxu0 0
  %1225 = vmatpush2.bf16.msra.mxu0 0
  %1226 = vmatprep.mubr.bf16.mxu0 0
  %1227 = vmatmul.mubr.bf16.gmra.mxu0 %v1192
  %v1228 = vpop.f32.mrf.mxu0
  %v1229 = vadd.f32 %v1189, %v1228
  %v1230 = vpop.f32.mrf.mxu0
  %v1231 = vpop.f32.mrf.mxu0
  %v1232 = vpop.f32.mrf.mxu0
  %1233 = vdwg.mxu0
  %v1234 = vtanh.pop %v1229
  %v1235 = vpack.c.bf16 %v1234, %v1234
  %v1237 = vsel %vm294, %v1235, 0
  %1239 = vmatprep.subr.bf16.mxu0 0
  %1240 = vmatpush1.bf16.msra.mxu0 0
  %1241 = vmatprep.subr.bf16.mxu0 0
  %1242 = vmatpush1.bf16.msra.mxu0 0
  %1243 = vmatprep.subr.bf16.mxu0 0
  %1244 = vmatpush1.bf16.msra.mxu0 0
  %1245 = vmatprep.subr.bf16.mxu0 0
  %1246 = vmatpush1.bf16.msra.mxu0 0
  %1247 = vmatprep.subr.bf16.mxu0 0
  %1248 = vmatpush1.bf16.msra.mxu0 %v500
  %1249 = vmatprep.subr.bf16.mxu0 0
  %1250 = vmatpush1.bf16.msra.mxu0 %v499
  %1251 = vmatprep.subr.bf16.mxu0 0
  %1252 = vmatpush1.bf16.msra.mxu0 %v498
  %1253 = vmatprep.subr.bf16.mxu0 0
  %1254 = vmatpush1.bf16.msra.mxu0 %v497
  %1255 = vmatprep.subr.bf16.mxu0 0
  %1256 = vmatpush2.bf16.msra.mxu0 0
  %1257 = vmatprep.subr.bf16.mxu0 0
  %1258 = vmatpush2.bf16.msra.mxu0 0
  %1259 = vmatprep.subr.bf16.mxu0 0
  %1260 = vmatpush2.bf16.msra.mxu0 0
  %1261 = vmatprep.subr.bf16.mxu0 0
  %1262 = vmatpush2.bf16.msra.mxu0 0
  %1263 = vmatprep.subr.bf16.mxu0 0
  %1264 = vmatpush2.bf16.msra.mxu0 0
  %1265 = vmatprep.subr.bf16.mxu0 0
  %1266 = vmatpush2.bf16.msra.mxu0 0
  %1267 = vmatprep.subr.bf16.mxu0 0
  %1268 = vmatpush2.bf16.msra.mxu0 0
  %1269 = vmatprep.subr.bf16.mxu0 0
  %1270 = vmatpush2.bf16.msra.mxu0 0
  %1271 = vmatprep.mubr.bf16.mxu0 0
  %1272 = vmatmul.mubr.bf16.gmra.mxu0 %v1237
  %v1273 = vpop.f32.mrf.mxu0
  %v1274 = vadd.f32 %v505, %v1273
  %v1275 = vpop.f32.mrf.mxu0
  %v1276 = vpop.f32.mrf.mxu0
  %v1277 = vpop.f32.mrf.mxu0
  %1278 = vdwg.mxu0
  %v1279 = vtanh.pop %v1274
  %v1280 = vpack.c.bf16 %v1279, %v1279
  %v1282 = vsel %vm294, %v1280, 0
  %1284 = vmatprep.subr.bf16.mxu0 0
  %1285 = vmatpush1.bf16.msra.mxu0 0
  %1286 = vmatprep.subr.bf16.mxu0 0
  %1287 = vmatpush1.bf16.msra.mxu0 0
  %1288 = vmatprep.subr.bf16.mxu0 0
  %1289 = vmatpush1.bf16.msra.mxu0 0
  %1290 = vmatprep.subr.bf16.mxu0 0
  %1291 = vmatpush1.bf16.msra.mxu0 0
  %1292 = vmatprep.subr.bf16.mxu0 0
  %1293 = vmatpush1.bf16.msra.mxu0 %v289
  %1294 = vmatprep.subr.bf16.mxu0 0
  %1295 = vmatpush1.bf16.msra.mxu0 %v288
  %1296 = vmatprep.subr.bf16.mxu0 0
  %1297 = vmatpush1.bf16.msra.mxu0 %v287
  %1298 = vmatprep.subr.bf16.mxu0 0
  %1299 = vmatpush1.bf16.msra.mxu0 %v286
  %1300 = vmatprep.subr.bf16.mxu0 0
  %1301 = vmatpush2.bf16.msra.mxu0 0
  %1302 = vmatprep.subr.bf16.mxu0 0
  %1303 = vmatpush2.bf16.msra.mxu0 0
  %1304 = vmatprep.subr.bf16.mxu0 0
  %1305 = vmatpush2.bf16.msra.mxu0 0
  %1306 = vmatprep.subr.bf16.mxu0 0
  %1307 = vmatpush2.bf16.msra.mxu0 0
  %1308 = vmatprep.subr.bf16.mxu0 0
  %1309 = vmatpush2.bf16.msra.mxu0 0
  %1310 = vmatprep.subr.bf16.mxu0 0
  %1311 = vmatpush2.bf16.msra.mxu0 0
  %1312 = vmatprep.subr.bf16.mxu0 0
  %1313 = vmatpush2.bf16.msra.mxu0 0
  %1314 = vmatprep.subr.bf16.mxu0 0
  %1315 = vmatpush2.bf16.msra.mxu0 0
  %1316 = vmatprep.mubr.bf16.mxu0 0
  %1317 = vmatmul.mubr.bf16.gmra.mxu0 %v1282
  %v1318 = vpop.f32.mrf.mxu0
  %v1319 = vadd.f32 %v22, %v1318
  %v1320 = vpop.f32.mrf.mxu0
  %v1321 = vpop.f32.mrf.mxu0
  %v1322 = vpop.f32.mrf.mxu0
  %1323 = vdwg.mxu0
  %v1324 = vtanh.pop %v1319
  %v1325 = vpack.c.bf16 %v1324, %v1324
  %v1327 = vsel %vm294, %v1325, 0
  %1329 = vmatprep.subr.bf16.mxu0 0
  %1330 = vmatpush1.bf16.msra.mxu0 0
  %1331 = vmatprep.subr.bf16.mxu0 0
  %1332 = vmatpush1.bf16.msra.mxu0 0
  %1333 = vmatprep.subr.bf16.mxu0 0
  %1334 = vmatpush1.bf16.msra.mxu0 0
  %1335 = vmatprep.subr.bf16.mxu0 0
  %1336 = vmatpush1.bf16.msra.mxu0 0
  %1337 = vmatprep.subr.bf16.mxu0 0
  %1338 = vmatpush1.bf16.msra.mxu0 %v359
  %1339 = vmatprep.subr.bf16.mxu0 0
  %1340 = vmatpush1.bf16.msra.mxu0 %v358
  %1341 = vmatprep.subr.bf16.mxu0 0
  %1342 = vmatpush1.bf16.msra.mxu0 %v357
  %1343 = vmatprep.subr.bf16.mxu0 0
  %1344 = vmatpush1.bf16.msra.mxu0 %v356
  %1345 = vmatprep.subr.bf16.mxu0 0
  %1346 = vmatpush2.bf16.msra.mxu0 0
  %1347 = vmatprep.subr.bf16.mxu0 0
  %1348 = vmatpush2.bf16.msra.mxu0 0
  %1349 = vmatprep.subr.bf16.mxu0 0
  %1350 = vmatpush2.bf16.msra.mxu0 0
  %1351 = vmatprep.subr.bf16.mxu0 0
  %1352 = vmatpush2.bf16.msra.mxu0 0
  %1353 = vmatprep.subr.bf16.mxu0 0
  %1354 = vmatpush2.bf16.msra.mxu0 0
  %1355 = vmatprep.subr.bf16.mxu0 0
  %1356 = vmatpush2.bf16.msra.mxu0 0
  %1357 = vmatprep.subr.bf16.mxu0 0
  %1358 = vmatpush2.bf16.msra.mxu0 0
  %1359 = vmatprep.subr.bf16.mxu0 0
  %1360 = vmatpush2.bf16.msra.mxu0 0
  %1361 = vmatprep.mubr.bf16.mxu0 0
  %1362 = vmatmul.mubr.bf16.gmra.mxu0 %v1327
  %v1363 = vpop.f32.mrf.mxu0
  %v1364 = vadd.f32 %v365, %v1363
  %v1365 = vpop.f32.mrf.mxu0
  %v1366 = vpop.f32.mrf.mxu0
  %v1367 = vpop.f32.mrf.mxu0
  %1368 = vdwg.mxu0
  %v1369 = vtanh.pop %v1364
  %v1370 = vpack.c.bf16 %v1369, %v1369
  %v1371 = vrot.slane %v233, 5
  %v1374 = vsel %vm294, %v1370, 0
  %1376 = vmatprep.subr.bf16.mxu0 0
  %1377 = vmatpush1.bf16.msra.mxu0 0
  %1378 = vmatprep.subr.bf16.mxu0 0
  %1379 = vmatpush1.bf16.msra.mxu0 0
  %1380 = vmatprep.subr.bf16.mxu0 0
  %1381 = vmatpush1.bf16.msra.mxu0 0
  %1382 = vmatprep.subr.bf16.mxu0 0
  %1383 = vmatpush1.bf16.msra.mxu0 0
  %1384 = vmatprep.subr.bf16.mxu0 0
  %1385 = vmatpush1.bf16.msra.mxu0 %v431
  %1386 = vmatprep.subr.bf16.mxu0 0
  %1387 = vmatpush1.bf16.msra.mxu0 %v430
  %1388 = vmatprep.subr.bf16.mxu0 0
  %1389 = vmatpush1.bf16.msra.mxu0 %v429
  %1390 = vmatprep.subr.bf16.mxu0 0
  %1391 = vmatpush1.bf16.msra.mxu0 %v428
  %1392 = vmatprep.subr.bf16.mxu0 0
  %1393 = vmatpush2.bf16.msra.mxu0 0
  %1394 = vmatprep.subr.bf16.mxu0 0
  %1395 = vmatpush2.bf16.msra.mxu0 0
  %1396 = vmatprep.subr.bf16.mxu0 0
  %1397 = vmatpush2.bf16.msra.mxu0 0
  %1398 = vmatprep.subr.bf16.mxu0 0
  %1399 = vmatpush2.bf16.msra.mxu0 0
  %1400 = vmatprep.subr.bf16.mxu0 0
  %1401 = vmatpush2.bf16.msra.mxu0 0
  %1402 = vmatprep.subr.bf16.mxu0 0
  %1403 = vmatpush2.bf16.msra.mxu0 0
  %1404 = vmatprep.subr.bf16.mxu0 0
  %1405 = vmatpush2.bf16.msra.mxu0 0
  %1406 = vmatprep.subr.bf16.mxu0 0
  %1407 = vmatpush2.bf16.msra.mxu0 0
  %1408 = vmatprep.mubr.bf16.mxu0 0
  %1409 = vmatmul.mubr.bf16.gmra.mxu0 %v1374
  %v1410 = vpop.f32.mrf.mxu0
  %v1411 = vadd.f32 %v1371, %v1410
  %v1412 = vpop.f32.mrf.mxu0
  %v1413 = vpop.f32.mrf.mxu0
  %v1414 = vpop.f32.mrf.mxu0
  %1415 = vdwg.mxu0
  %v1416 = vtanh.pop %v1411
  %v1417 = vpack.c.bf16 %v1416, %v1416
  %v1419 = vsel %vm294, %v1417, 0
  %1421 = vmatprep.subr.bf16.mxu0 0
  %1422 = vmatpush1.bf16.msra.mxu0 0
  %1423 = vmatprep.subr.bf16.mxu0 0
  %1424 = vmatpush1.bf16.msra.mxu0 0
  %1425 = vmatprep.subr.bf16.mxu0 0
  %1426 = vmatpush1.bf16.msra.mxu0 0
  %1427 = vmatprep.subr.bf16.mxu0 0
  %1428 = vmatpush1.bf16.msra.mxu0 0
  %1429 = vmatprep.subr.bf16.mxu0 0
  %1430 = vmatpush1.bf16.msra.mxu0 %v500
  %1431 = vmatprep.subr.bf16.mxu0 0
  %1432 = vmatpush1.bf16.msra.mxu0 %v499
  %1433 = vmatprep.subr.bf16.mxu0 0
  %1434 = vmatpush1.bf16.msra.mxu0 %v498
  %1435 = vmatprep.subr.bf16.mxu0 0
  %1436 = vmatpush1.bf16.msra.mxu0 %v497
  %1437 = vmatprep.subr.bf16.mxu0 0
  %1438 = vmatpush2.bf16.msra.mxu0 0
  %1439 = vmatprep.subr.bf16.mxu0 0
  %1440 = vmatpush2.bf16.msra.mxu0 0
  %1441 = vmatprep.subr.bf16.mxu0 0
  %1442 = vmatpush2.bf16.msra.mxu0 0
  %1443 = vmatprep.subr.bf16.mxu0 0
  %1444 = vmatpush2.bf16.msra.mxu0 0
  %1445 = vmatprep.subr.bf16.mxu0 0
  %1446 = vmatpush2.bf16.msra.mxu0 0
  %1447 = vmatprep.subr.bf16.mxu0 0
  %1448 = vmatpush2.bf16.msra.mxu0 0
  %1449 = vmatprep.subr.bf16.mxu0 0
  %1450 = vmatpush2.bf16.msra.mxu0 0
  %1451 = vmatprep.subr.bf16.mxu0 0
  %1452 = vmatpush2.bf16.msra.mxu0 0
  %1453 = vmatprep.mubr.bf16.mxu0 0
  %1454 = vmatmul.mubr.bf16.gmra.mxu0 %v1419
  %v1455 = vpop.f32.mrf.mxu0
  %v1456 = vadd.f32 %v505, %v1455
  %v1457 = vpop.f32.mrf.mxu0
  %v1458 = vpop.f32.mrf.mxu0
  %v1459 = vpop.f32.mrf.mxu0
  %1460 = vdwg.mxu0
  %v1461 = vtanh.pop %v1456
  %v1462 = vpack.c.bf16 %v1461, %v1461
  %v1464 = vsel %vm294, %v1462, 0
  %1466 = vmatprep.subr.bf16.mxu0 0
  %1467 = vmatpush1.bf16.msra.mxu0 0
  %1468 = vmatprep.subr.bf16.mxu0 0
  %1469 = vmatpush1.bf16.msra.mxu0 0
  %1470 = vmatprep.subr.bf16.mxu0 0
  %1471 = vmatpush1.bf16.msra.mxu0 0
  %1472 = vmatprep.subr.bf16.mxu0 0
  %1473 = vmatpush1.bf16.msra.mxu0 0
  %1474 = vmatprep.subr.bf16.mxu0 0
  %1475 = vmatpush1.bf16.msra.mxu0 %v289
  %1476 = vmatprep.subr.bf16.mxu0 0
  %1477 = vmatpush1.bf16.msra.mxu0 %v288
  %1478 = vmatprep.subr.bf16.mxu0 0
  %1479 = vmatpush1.bf16.msra.mxu0 %v287
  %1480 = vmatprep.subr.bf16.mxu0 0
  %1481 = vmatpush1.bf16.msra.mxu0 %v286
  %1482 = vmatprep.subr.bf16.mxu0 0
  %1483 = vmatpush2.bf16.msra.mxu0 0
  %1484 = vmatprep.subr.bf16.mxu0 0
  %1485 = vmatpush2.bf16.msra.mxu0 0
  %1486 = vmatprep.subr.bf16.mxu0 0
  %1487 = vmatpush2.bf16.msra.mxu0 0
  %1488 = vmatprep.subr.bf16.mxu0 0
  %1489 = vmatpush2.bf16.msra.mxu0 0
  %1490 = vmatprep.subr.bf16.mxu0 0
  %1491 = vmatpush2.bf16.msra.mxu0 0
  %1492 = vmatprep.subr.bf16.mxu0 0
  %1493 = vmatpush2.bf16.msra.mxu0 0
  %1494 = vmatprep.subr.bf16.mxu0 0
  %1495 = vmatpush2.bf16.msra.mxu0 0
  %1496 = vmatprep.subr.bf16.mxu0 0
  %1497 = vmatpush2.bf16.msra.mxu0 0
  %1498 = vmatprep.mubr.bf16.mxu0 0
  %1499 = vmatmul.mubr.bf16.gmra.mxu0 %v1464
  %v1500 = vpop.f32.mrf.mxu0
  %v1501 = vadd.f32 %v22, %v1500
  %v1502 = vpop.f32.mrf.mxu0
  %v1503 = vpop.f32.mrf.mxu0
  %v1504 = vpop.f32.mrf.mxu0
  %1505 = vdwg.mxu0
  %v1506 = vtanh.pop %v1501
  %v1507 = vpack.c.bf16 %v1506, %v1506
  %v1509 = vsel %vm294, %v1507, 0
  %1511 = vmatprep.subr.bf16.mxu0 0
  %1512 = vmatpush1.bf16.msra.mxu0 0
  %1513 = vmatprep.subr.bf16.mxu0 0
  %1514 = vmatpush1.bf16.msra.mxu0 0
  %1515 = vmatprep.subr.bf16.mxu0 0
  %1516 = vmatpush1.bf16.msra.mxu0 0
  %1517 = vmatprep.subr.bf16.mxu0 0
  %1518 = vmatpush1.bf16.msra.mxu0 0
  %1519 = vmatprep.subr.bf16.mxu0 0
  %1520 = vmatpush1.bf16.msra.mxu0 %v359
  %1521 = vmatprep.subr.bf16.mxu0 0
  %1522 = vmatpush1.bf16.msra.mxu0 %v358
  %1523 = vmatprep.subr.bf16.mxu0 0
  %1524 = vmatpush1.bf16.msra.mxu0 %v357
  %1525 = vmatprep.subr.bf16.mxu0 0
  %1526 = vmatpush1.bf16.msra.mxu0 %v356
  %1527 = vmatprep.subr.bf16.mxu0 0
  %1528 = vmatpush2.bf16.msra.mxu0 0
  %1529 = vmatprep.subr.bf16.mxu0 0
  %1530 = vmatpush2.bf16.msra.mxu0 0
  %1531 = vmatprep.subr.bf16.mxu0 0
  %1532 = vmatpush2.bf16.msra.mxu0 0
  %1533 = vmatprep.subr.bf16.mxu0 0
  %1534 = vmatpush2.bf16.msra.mxu0 0
  %1535 = vmatprep.subr.bf16.mxu0 0
  %1536 = vmatpush2.bf16.msra.mxu0 0
  %1537 = vmatprep.subr.bf16.mxu0 0
  %1538 = vmatpush2.bf16.msra.mxu0 0
  %1539 = vmatprep.subr.bf16.mxu0 0
  %1540 = vmatpush2.bf16.msra.mxu0 0
  %1541 = vmatprep.subr.bf16.mxu0 0
  %1542 = vmatpush2.bf16.msra.mxu0 0
  %1543 = vmatprep.mubr.bf16.mxu0 0
  %1544 = vmatmul.mubr.bf16.gmra.mxu0 %v1509
  %v1545 = vpop.f32.mrf.mxu0
  %v1546 = vadd.f32 %v365, %v1545
  %v1547 = vpop.f32.mrf.mxu0
  %v1548 = vpop.f32.mrf.mxu0
  %v1549 = vpop.f32.mrf.mxu0
  %1550 = vdwg.mxu0
  %v1551 = vtanh.pop %v1546
  %v1552 = vpack.c.bf16 %v1551, %v1551
  %v1553 = vrot.slane %v233, 6
  %v1556 = vsel %vm294, %v1552, 0
  %1558 = vmatprep.subr.bf16.mxu0 0
  %1559 = vmatpush1.bf16.msra.mxu0 0
  %1560 = vmatprep.subr.bf16.mxu0 0
  %1561 = vmatpush1.bf16.msra.mxu0 0
  %1562 = vmatprep.subr.bf16.mxu0 0
  %1563 = vmatpush1.bf16.msra.mxu0 0
  %1564 = vmatprep.subr.bf16.mxu0 0
  %1565 = vmatpush1.bf16.msra.mxu0 0
  %1566 = vmatprep.subr.bf16.mxu0 0
  %1567 = vmatpush1.bf16.msra.mxu0 %v431
  %1568 = vmatprep.subr.bf16.mxu0 0
  %1569 = vmatpush1.bf16.msra.mxu0 %v430
  %1570 = vmatprep.subr.bf16.mxu0 0
  %1571 = vmatpush1.bf16.msra.mxu0 %v429
  %1572 = vmatprep.subr.bf16.mxu0 0
  %1573 = vmatpush1.bf16.msra.mxu0 %v428
  %1574 = vmatprep.subr.bf16.mxu0 0
  %1575 = vmatpush2.bf16.msra.mxu0 0
  %1576 = vmatprep.subr.bf16.mxu0 0
  %1577 = vmatpush2.bf16.msra.mxu0 0
  %1578 = vmatprep.subr.bf16.mxu0 0
  %1579 = vmatpush2.bf16.msra.mxu0 0
  %1580 = vmatprep.subr.bf16.mxu0 0
  %1581 = vmatpush2.bf16.msra.mxu0 0
  %1582 = vmatprep.subr.bf16.mxu0 0
  %1583 = vmatpush2.bf16.msra.mxu0 0
  %1584 = vmatprep.subr.bf16.mxu0 0
  %1585 = vmatpush2.bf16.msra.mxu0 0
  %1586 = vmatprep.subr.bf16.mxu0 0
  %1587 = vmatpush2.bf16.msra.mxu0 0
  %1588 = vmatprep.subr.bf16.mxu0 0
  %1589 = vmatpush2.bf16.msra.mxu0 0
  %1590 = vmatprep.mubr.bf16.mxu0 0
  %1591 = vmatmul.mubr.bf16.gmra.mxu0 %v1556
  %v1592 = vpop.f32.mrf.mxu0
  %v1593 = vadd.f32 %v1553, %v1592
  %v1594 = vpop.f32.mrf.mxu0
  %v1595 = vpop.f32.mrf.mxu0
  %v1596 = vpop.f32.mrf.mxu0
  %1597 = vdwg.mxu0
  %v1598 = vtanh.pop %v1593
  %v1599 = vpack.c.bf16 %v1598, %v1598
  %v1601 = vsel %vm294, %v1599, 0
  %1603 = vmatprep.subr.bf16.mxu0 0
  %1604 = vmatpush1.bf16.msra.mxu0 0
  %1605 = vmatprep.subr.bf16.mxu0 0
  %1606 = vmatpush1.bf16.msra.mxu0 0
  %1607 = vmatprep.subr.bf16.mxu0 0
  %1608 = vmatpush1.bf16.msra.mxu0 0
  %1609 = vmatprep.subr.bf16.mxu0 0
  %1610 = vmatpush1.bf16.msra.mxu0 0
  %1611 = vmatprep.subr.bf16.mxu0 0
  %1612 = vmatpush1.bf16.msra.mxu0 %v500
  %1613 = vmatprep.subr.bf16.mxu0 0
  %1614 = vmatpush1.bf16.msra.mxu0 %v499
  %1615 = vmatprep.subr.bf16.mxu0 0
  %1616 = vmatpush1.bf16.msra.mxu0 %v498
  %1617 = vmatprep.subr.bf16.mxu0 0
  %1618 = vmatpush1.bf16.msra.mxu0 %v497
  %1619 = vmatprep.subr.bf16.mxu0 0
  %1620 = vmatpush2.bf16.msra.mxu0 0
  %1621 = vmatprep.subr.bf16.mxu0 0
  %1622 = vmatpush2.bf16.msra.mxu0 0
  %1623 = vmatprep.subr.bf16.mxu0 0
  %1624 = vmatpush2.bf16.msra.mxu0 0
  %1625 = vmatprep.subr.bf16.mxu0 0
  %1626 = vmatpush2.bf16.msra.mxu0 0
  %1627 = vmatprep.subr.bf16.mxu0 0
  %1628 = vmatpush2.bf16.msra.mxu0 0
  %1629 = vmatprep.subr.bf16.mxu0 0
  %1630 = vmatpush2.bf16.msra.mxu0 0
  %1631 = vmatprep.subr.bf16.mxu0 0
  %1632 = vmatpush2.bf16.msra.mxu0 0
  %1633 = vmatprep.subr.bf16.mxu0 0
  %1634 = vmatpush2.bf16.msra.mxu0 0
  %1635 = vmatprep.mubr.bf16.mxu0 0
  %1636 = vmatmul.mubr.bf16.gmra.mxu0 %v1601
  %v1637 = vpop.f32.mrf.mxu0
  %v1638 = vadd.f32 %v505, %v1637
  %v1639 = vpop.f32.mrf.mxu0
  %v1640 = vpop.f32.mrf.mxu0
  %v1641 = vpop.f32.mrf.mxu0
  %1642 = vdwg.mxu0
  %v1643 = vtanh.pop %v1638
  %v1644 = vpack.c.bf16 %v1643, %v1643
  %v1646 = vsel %vm294, %v1644, 0
  %1648 = vmatprep.subr.bf16.mxu0 0
  %1649 = vmatpush1.bf16.msra.mxu0 0
  %1650 = vmatprep.subr.bf16.mxu0 0
  %1651 = vmatpush1.bf16.msra.mxu0 0
  %1652 = vmatprep.subr.bf16.mxu0 0
  %1653 = vmatpush1.bf16.msra.mxu0 0
  %1654 = vmatprep.subr.bf16.mxu0 0
  %1655 = vmatpush1.bf16.msra.mxu0 0
  %1656 = vmatprep.subr.bf16.mxu0 0
  %1657 = vmatpush1.bf16.msra.mxu0 %v289
  %1658 = vmatprep.subr.bf16.mxu0 0
  %1659 = vmatpush1.bf16.msra.mxu0 %v288
  %1660 = vmatprep.subr.bf16.mxu0 0
  %1661 = vmatpush1.bf16.msra.mxu0 %v287
  %1662 = vmatprep.subr.bf16.mxu0 0
  %1663 = vmatpush1.bf16.msra.mxu0 %v286
  %1664 = vmatprep.subr.bf16.mxu0 0
  %1665 = vmatpush2.bf16.msra.mxu0 0
  %1666 = vmatprep.subr.bf16.mxu0 0
  %1667 = vmatpush2.bf16.msra.mxu0 0
  %1668 = vmatprep.subr.bf16.mxu0 0
  %1669 = vmatpush2.bf16.msra.mxu0 0
  %1670 = vmatprep.subr.bf16.mxu0 0
  %1671 = vmatpush2.bf16.msra.mxu0 0
  %1672 = vmatprep.subr.bf16.mxu0 0
  %1673 = vmatpush2.bf16.msra.mxu0 0
  %1674 = vmatprep.subr.bf16.mxu0 0
  %1675 = vmatpush2.bf16.msra.mxu0 0
  %1676 = vmatprep.subr.bf16.mxu0 0
  %1677 = vmatpush2.bf16.msra.mxu0 0
  %1678 = vmatprep.subr.bf16.mxu0 0
  %1679 = vmatpush2.bf16.msra.mxu0 0
  %1680 = vmatprep.mubr.bf16.mxu0 0
  %1681 = vmatmul.mubr.bf16.gmra.mxu0 %v1646
  %v1682 = vpop.f32.mrf.mxu0
  %v1683 = vadd.f32 %v22, %v1682
  %v1684 = vpop.f32.mrf.mxu0
  %v1685 = vpop.f32.mrf.mxu0
  %v1686 = vpop.f32.mrf.mxu0
  %1687 = vdwg.mxu0
  %v1688 = vtanh.pop %v1683
  %v1689 = vpack.c.bf16 %v1688, %v1688
  %v1691 = vsel %vm294, %v1689, 0
  %1693 = vmatprep.subr.bf16.mxu0 0
  %1694 = vmatpush1.bf16.msra.mxu0 0
  %1695 = vmatprep.subr.bf16.mxu0 0
  %1696 = vmatpush1.bf16.msra.mxu0 0
  %1697 = vmatprep.subr.bf16.mxu0 0
  %1698 = vmatpush1.bf16.msra.mxu0 0
  %1699 = vmatprep.subr.bf16.mxu0 0
  %1700 = vmatpush1.bf16.msra.mxu0 0
  %1701 = vmatprep.subr.bf16.mxu0 0
  %1702 = vmatpush1.bf16.msra.mxu0 %v359
  %1703 = vmatprep.subr.bf16.mxu0 0
  %1704 = vmatpush1.bf16.msra.mxu0 %v358
  %1705 = vmatprep.subr.bf16.mxu0 0
  %1706 = vmatpush1.bf16.msra.mxu0 %v357
  %1707 = vmatprep.subr.bf16.mxu0 0
  %1708 = vmatpush1.bf16.msra.mxu0 %v356
  %1709 = vmatprep.subr.bf16.mxu0 0
  %1710 = vmatpush2.bf16.msra.mxu0 0
  %1711 = vmatprep.subr.bf16.mxu0 0
  %1712 = vmatpush2.bf16.msra.mxu0 0
  %1713 = vmatprep.subr.bf16.mxu0 0
  %1714 = vmatpush2.bf16.msra.mxu0 0
  %1715 = vmatprep.subr.bf16.mxu0 0
  %1716 = vmatpush2.bf16.msra.mxu0 0
  %1717 = vmatprep.subr.bf16.mxu0 0
  %1718 = vmatpush2.bf16.msra.mxu0 0
  %1719 = vmatprep.subr.bf16.mxu0 0
  %1720 = vmatpush2.bf16.msra.mxu0 0
  %1721 = vmatprep.subr.bf16.mxu0 0
  %1722 = vmatpush2.bf16.msra.mxu0 0
  %1723 = vmatprep.subr.bf16.mxu0 0
  %1724 = vmatpush2.bf16.msra.mxu0 0
  %1725 = vmatprep.mubr.bf16.mxu0 0
  %1726 = vmatmul.mubr.bf16.gmra.mxu0 %v1691
  %v1727 = vpop.f32.mrf.mxu0
  %v1728 = vadd.f32 %v365, %v1727
  %v1729 = vpop.f32.mrf.mxu0
  %v1730 = vpop.f32.mrf.mxu0
  %v1731 = vpop.f32.mrf.mxu0
  %1732 = vdwg.mxu0
  %v1733 = vtanh.pop %v1728
  %v1734 = vpack.c.bf16 %v1733, %v1733
  %v1735 = vrot.slane %v233, 7
  %v1738 = vsel %vm294, %v1734, 0
  %1740 = vmatprep.subr.bf16.mxu0 0
  %1741 = vmatpush1.bf16.msra.mxu0 0
  %1742 = vmatprep.subr.bf16.mxu0 0
  %1743 = vmatpush1.bf16.msra.mxu0 0
  %1744 = vmatprep.subr.bf16.mxu0 0
  %1745 = vmatpush1.bf16.msra.mxu0 0
  %1746 = vmatprep.subr.bf16.mxu0 0
  %1747 = vmatpush1.bf16.msra.mxu0 0
  %1748 = vmatprep.subr.bf16.mxu0 0
  %1749 = vmatpush1.bf16.msra.mxu0 %v431
  %1750 = vmatprep.subr.bf16.mxu0 0
  %1751 = vmatpush1.bf16.msra.mxu0 %v430
  %1752 = vmatprep.subr.bf16.mxu0 0
  %1753 = vmatpush1.bf16.msra.mxu0 %v429
  %1754 = vmatprep.subr.bf16.mxu0 0
  %1755 = vmatpush1.bf16.msra.mxu0 %v428
  %1756 = vmatprep.subr.bf16.mxu0 0
  %1757 = vmatpush2.bf16.msra.mxu0 0
  %1758 = vmatprep.subr.bf16.mxu0 0
  %1759 = vmatpush2.bf16.msra.mxu0 0
  %1760 = vmatprep.subr.bf16.mxu0 0
  %1761 = vmatpush2.bf16.msra.mxu0 0
  %1762 = vmatprep.subr.bf16.mxu0 0
  %1763 = vmatpush2.bf16.msra.mxu0 0
  %1764 = vmatprep.subr.bf16.mxu0 0
  %1765 = vmatpush2.bf16.msra.mxu0 0
  %1766 = vmatprep.subr.bf16.mxu0 0
  %1767 = vmatpush2.bf16.msra.mxu0 0
  %1768 = vmatprep.subr.bf16.mxu0 0
  %1769 = vmatpush2.bf16.msra.mxu0 0
  %1770 = vmatprep.subr.bf16.mxu0 0
  %1771 = vmatpush2.bf16.msra.mxu0 0
  %1772 = vmatprep.mubr.bf16.mxu0 0
  %1773 = vmatmul.mubr.bf16.gmra.mxu0 %v1738
  %v1774 = vpop.f32.mrf.mxu0
  %v1775 = vadd.f32 %v1735, %v1774
  %v1776 = vpop.f32.mrf.mxu0
  %v1777 = vpop.f32.mrf.mxu0
  %v1778 = vpop.f32.mrf.mxu0
  %1779 = vdwg.mxu0
  %v1780 = vtanh.pop %v1775
  %v1781 = vpack.c.bf16 %v1780, %v1780
  %v1783 = vsel %vm294, %v1781, 0
  %1785 = vmatprep.subr.bf16.mxu0 0
  %1786 = vmatpush1.bf16.msra.mxu0 0
  %1787 = vmatprep.subr.bf16.mxu0 0
  %1788 = vmatpush1.bf16.msra.mxu0 0
  %1789 = vmatprep.subr.bf16.mxu0 0
  %1790 = vmatpush1.bf16.msra.mxu0 0
  %1791 = vmatprep.subr.bf16.mxu0 0
  %1792 = vmatpush1.bf16.msra.mxu0 0
  %1793 = vmatprep.subr.bf16.mxu0 0
  %1794 = vmatpush1.bf16.msra.mxu0 %v500
  %1795 = vmatprep.subr.bf16.mxu0 0
  %1796 = vmatpush1.bf16.msra.mxu0 %v499
  %1797 = vmatprep.subr.bf16.mxu0 0
  %1798 = vmatpush1.bf16.msra.mxu0 %v498
  %1799 = vmatprep.subr.bf16.mxu0 0
  %1800 = vmatpush1.bf16.msra.mxu0 %v497
  %1801 = vmatprep.subr.bf16.mxu0 0
  %1802 = vmatpush2.bf16.msra.mxu0 0
  %1803 = vmatprep.subr.bf16.mxu0 0
  %1804 = vmatpush2.bf16.msra.mxu0 0
  %1805 = vmatprep.subr.bf16.mxu0 0
  %1806 = vmatpush2.bf16.msra.mxu0 0
  %1807 = vmatprep.subr.bf16.mxu0 0
  %1808 = vmatpush2.bf16.msra.mxu0 0
  %1809 = vmatprep.subr.bf16.mxu0 0
  %1810 = vmatpush2.bf16.msra.mxu0 0
  %1811 = vmatprep.subr.bf16.mxu0 0
  %1812 = vmatpush2.bf16.msra.mxu0 0
  %1813 = vmatprep.subr.bf16.mxu0 0
  %1814 = vmatpush2.bf16.msra.mxu0 0
  %1815 = vmatprep.subr.bf16.mxu0 0
  %1816 = vmatpush2.bf16.msra.mxu0 0
  %1817 = vmatprep.mubr.bf16.mxu0 0
  %1818 = vmatmul.mubr.bf16.gmra.mxu0 %v1783
  %v1819 = vpop.f32.mrf.mxu0
  %v1820 = vadd.f32 %v505, %v1819
  %v1821 = vpop.f32.mrf.mxu0
  %v1822 = vpop.f32.mrf.mxu0
  %v1823 = vpop.f32.mrf.mxu0
  %1824 = vdwg.mxu0
  %v1825 = vtanh.pop %v1820
  %v1826 = vld [vmem:[%s2] sm:$0xf]
  %v1827 = vld [vmem:[%s2 + $0x4] sm:$0xf]
  %v1828 = vld [vmem:[%s2 + $0x8] sm:$0xf]
  %v1829 = vld [vmem:[%s2 + $0xc] sm:$0xf]
  %v1830 = vld [vmem:[%s2 + $0x10] sm:$0xf]
  %v1831 = vld [vmem:[%s2 + $0x14] sm:$0xf]
  %v1832 = vld [vmem:[%s2 + $0x18] sm:$0xf]
  %v1833 = vld [vmem:[%s2 + $0x1c] sm:$0xf]
  %v1834 = vpack.c.bf16 %v1825, %v1825
  %v1843 = vunpack.c.l.b16 %v1826
  %v1844 = vunpack.c.l.b16 %v1827
  %v1845 = vunpack.c.l.b16 %v1828
  %v1846 = vunpack.c.l.b16 %v1829
  %v1847 = vunpack.c.l.b16 %v1830
  %v1848 = vunpack.c.l.b16 %v1831
  %v1849 = vunpack.c.l.b16 %v1832
  %v1850 = vunpack.c.l.b16 %v1833
  %v1851 = vpack.c.b16 %v1844, %v1843
  %v1852 = vpack.c.b16 %v1846, %v1845
  %v1853 = vpack.c.b16 %v1848, %v1847
  %v1854 = vpack.c.b16 %v1850, %v1849
  %v1860 = vsel %vm294, %v1834, 0
  %1862 = vmatprep.subr.bf16.mxu0 0
  %1863 = vmatpush1.bf16.msra.mxu0 0
  %1864 = vmatprep.subr.bf16.mxu0 0
  %1865 = vmatpush1.bf16.msra.mxu0 0
  %1866 = vmatprep.subr.bf16.mxu0 0
  %1867 = vmatpush1.bf16.msra.mxu0 0
  %1868 = vmatprep.subr.bf16.mxu0 0
  %1869 = vmatpush1.bf16.msra.mxu0 0
  %1870 = vmatprep.subr.bf16.mxu0 0
  %1871 = vmatpush1.bf16.msra.mxu0 %v1854
  %1872 = vmatprep.subr.bf16.mxu0 0
  %1873 = vmatpush1.bf16.msra.mxu0 %v1853
  %1874 = vmatprep.subr.bf16.mxu0 0
  %1875 = vmatpush1.bf16.msra.mxu0 %v1852
  %1876 = vmatprep.subr.bf16.mxu0 0
  %1877 = vmatpush1.bf16.msra.mxu0 %v1851
  %1878 = vmatprep.subr.bf16.mxu0 0
  %1879 = vmatpush2.bf16.msra.mxu0 0
  %1880 = vmatprep.subr.bf16.mxu0 0
  %1881 = vmatpush2.bf16.msra.mxu0 0
  %1882 = vmatprep.subr.bf16.mxu0 0
  %1883 = vmatpush2.bf16.msra.mxu0 0
  %1884 = vmatprep.subr.bf16.mxu0 0
  %1885 = vmatpush2.bf16.msra.mxu0 0
  %1886 = vmatprep.subr.bf16.mxu0 0
  %1887 = vmatpush2.bf16.msra.mxu0 0
  %1888 = vmatprep.subr.bf16.mxu0 0
  %1889 = vmatpush2.bf16.msra.mxu0 0
  %1890 = vmatprep.subr.bf16.mxu0 0
  %1891 = vmatpush2.bf16.msra.mxu0 0
  %1892 = vmatprep.subr.bf16.mxu0 0
  %1893 = vmatpush2.bf16.msra.mxu0 0
  %1894 = vmatprep.mubr.bf16.mxu0 0
  %1895 = vmatmul.mubr.bf16.gmra.mxu0 %v1860
  %v1896 = vpop.f32.mrf.mxu0
  %v1897 = vadd.f32 %v23, %v1896
  %v1898 = vpop.f32.mrf.mxu0
  %v1899 = vpop.f32.mrf.mxu0
  %v1900 = vpop.f32.mrf.mxu0
  %1901 = vdwg.mxu0
  %v1902 = vtanh.pop %v1897
  %v1903 = vld [vmem:[%s2 + $0x20] sm:$0xf]
  %v1904 = vld [vmem:[%s2 + $0x24] sm:$0xf]
  %v1905 = vld [vmem:[%s2 + $0x28] sm:$0xf]
  %v1906 = vld [vmem:[%s2 + $0x2c] sm:$0xf]
  %v1907 = vld [vmem:[%s2 + $0x30] sm:$0xf]
  %v1908 = vld [vmem:[%s2 + $0x34] sm:$0xf]
  %v1909 = vld [vmem:[%s2 + $0x38] sm:$0xf]
  %v1910 = vld [vmem:[%s2 + $0x3c] sm:$0xf]
  %v1911 = vpack.c.bf16 %v1902, %v1902
  %v1920 = vunpack.c.l.b16 %v1903
  %v1921 = vunpack.c.l.b16 %v1904
  %v1922 = vunpack.c.l.b16 %v1905
  %v1923 = vunpack.c.l.b16 %v1906
  %v1924 = vunpack.c.l.b16 %v1907
  %v1925 = vunpack.c.l.b16 %v1908
  %v1926 = vunpack.c.l.b16 %v1909
  %v1927 = vunpack.c.l.b16 %v1910
  %v1928 = vpack.c.b16 %v1921, %v1920
  %v1929 = vpack.c.b16 %v1923, %v1922
  %v1930 = vpack.c.b16 %v1925, %v1924
  %v1931 = vpack.c.b16 %v1927, %v1926
  %v1937 = vrot.slane %v23, 1
  %v1940 = vsel %vm294, %v1911, 0
  %1942 = vmatprep.subr.bf16.mxu0 0
  %1943 = vmatpush1.bf16.msra.mxu0 0
  %1944 = vmatprep.subr.bf16.mxu0 0
  %1945 = vmatpush1.bf16.msra.mxu0 0
  %1946 = vmatprep.subr.bf16.mxu0 0
  %1947 = vmatpush1.bf16.msra.mxu0 0
  %1948 = vmatprep.subr.bf16.mxu0 0
  %1949 = vmatpush1.bf16.msra.mxu0 0
  %1950 = vmatprep.subr.bf16.mxu0 0
  %1951 = vmatpush1.bf16.msra.mxu0 %v1931
  %1952 = vmatprep.subr.bf16.mxu0 0
  %1953 = vmatpush1.bf16.msra.mxu0 %v1930
  %1954 = vmatprep.subr.bf16.mxu0 0
  %1955 = vmatpush1.bf16.msra.mxu0 %v1929
  %1956 = vmatprep.subr.bf16.mxu0 0
  %1957 = vmatpush1.bf16.msra.mxu0 %v1928
  %1958 = vmatprep.subr.bf16.mxu0 0
  %1959 = vmatpush2.bf16.msra.mxu0 0
  %1960 = vmatprep.subr.bf16.mxu0 0
  %1961 = vmatpush2.bf16.msra.mxu0 0
  %1962 = vmatprep.subr.bf16.mxu0 0
  %1963 = vmatpush2.bf16.msra.mxu0 0
  %1964 = vmatprep.subr.bf16.mxu0 0
  %1965 = vmatpush2.bf16.msra.mxu0 0
  %1966 = vmatprep.subr.bf16.mxu0 0
  %1967 = vmatpush2.bf16.msra.mxu0 0
  %1968 = vmatprep.subr.bf16.mxu0 0
  %1969 = vmatpush2.bf16.msra.mxu0 0
  %1970 = vmatprep.subr.bf16.mxu0 0
  %1971 = vmatpush2.bf16.msra.mxu0 0
  %1972 = vmatprep.subr.bf16.mxu0 0
  %1973 = vmatpush2.bf16.msra.mxu0 0
  %1974 = vmatprep.mubr.bf16.mxu0 0
  %1975 = vmatmul.mubr.bf16.gmra.mxu0 %v1940
  %v1976 = vpop.f32.mrf.mxu0
  %v1977 = vadd.f32 %v1937, %v1976
  %v1978 = vpop.f32.mrf.mxu0
  %v1979 = vpop.f32.mrf.mxu0
  %v1980 = vpop.f32.mrf.mxu0
  %1981 = vdwg.mxu0
  %v1982 = vtanh.pop %v1977
  %v1983 = vld [vmem:[%s2 + $0x40] sm:$0xf]
  %v1984 = vld [vmem:[%s2 + $0x44] sm:$0xf]
  %v1985 = vld [vmem:[%s2 + $0x48] sm:$0xf]
  %v1986 = vld [vmem:[%s2 + $0x4c] sm:$0xf]
  %v1987 = vld [vmem:[%s2 + $0x50] sm:$0xf]
  %v1988 = vld [vmem:[%s2 + $0x54] sm:$0xf]
  %v1989 = vld [vmem:[%s2 + $0x58] sm:$0xf]
  %v1990 = vld [vmem:[%s2 + $0x5c] sm:$0xf]
  %v1991 = vpack.c.bf16 %v1982, %v1982
  %v2000 = vunpack.c.l.b16 %v1983
  %v2001 = vunpack.c.l.b16 %v1984
  %v2002 = vunpack.c.l.b16 %v1985
  %v2003 = vunpack.c.l.b16 %v1986
  %v2004 = vunpack.c.l.b16 %v1987
  %v2005 = vunpack.c.l.b16 %v1988
  %v2006 = vunpack.c.l.b16 %v1989
  %v2007 = vunpack.c.l.b16 %v1990
  %v2008 = vpack.c.b16 %v2001, %v2000
  %v2009 = vpack.c.b16 %v2003, %v2002
  %v2010 = vpack.c.b16 %v2005, %v2004
  %v2011 = vpack.c.b16 %v2007, %v2006
  %v2016 = vrot.slane %v23, 2
  %v2019 = vsel %vm294, %v1991, 0
  %2021 = vmatprep.subr.bf16.mxu0 0
  %2022 = vmatpush1.bf16.msra.mxu0 0
  %2023 = vmatprep.subr.bf16.mxu0 0
  %2024 = vmatpush1.bf16.msra.mxu0 0
  %2025 = vmatprep.subr.bf16.mxu0 0
  %2026 = vmatpush1.bf16.msra.mxu0 0
  %2027 = vmatprep.subr.bf16.mxu0 0
  %2028 = vmatpush1.bf16.msra.mxu0 0
  %2029 = vmatprep.subr.bf16.mxu0 0
  %2030 = vmatpush1.bf16.msra.mxu0 %v2011
  %2031 = vmatprep.subr.bf16.mxu0 0
  %2032 = vmatpush1.bf16.msra.mxu0 %v2010
  %2033 = vmatprep.subr.bf16.mxu0 0
  %2034 = vmatpush1.bf16.msra.mxu0 %v2009
  %2035 = vmatprep.subr.bf16.mxu0 0
  %2036 = vmatpush1.bf16.msra.mxu0 %v2008
  %2037 = vmatprep.subr.bf16.mxu0 0
  %2038 = vmatpush2.bf16.msra.mxu0 0
  %2039 = vmatprep.subr.bf16.mxu0 0
  %2040 = vmatpush2.bf16.msra.mxu0 0
  %2041 = vmatprep.subr.bf16.mxu0 0
  %2042 = vmatpush2.bf16.msra.mxu0 0
  %2043 = vmatprep.subr.bf16.mxu0 0
  %2044 = vmatpush2.bf16.msra.mxu0 0
  %2045 = vmatprep.subr.bf16.mxu0 0
  %2046 = vmatpush2.bf16.msra.mxu0 0
  %2047 = vmatprep.subr.bf16.mxu0 0
  %2048 = vmatpush2.bf16.msra.mxu0 0
  %2049 = vmatprep.subr.bf16.mxu0 0
  %2050 = vmatpush2.bf16.msra.mxu0 0
  %2051 = vmatprep.subr.bf16.mxu0 0
  %2052 = vmatpush2.bf16.msra.mxu0 0
  %2053 = vmatprep.mubr.bf16.mxu0 0
  %2054 = vmatmul.mubr.bf16.gmra.mxu0 %v2019
  %v2055 = vpop.f32.mrf.mxu0
  %v2056 = vadd.f32 %v2016, %v2055
  %v2057 = vpop.f32.mrf.mxu0
  %v2058 = vpop.f32.mrf.mxu0
  %v2059 = vpop.f32.mrf.mxu0
  %2060 = vdwg.mxu0
  %v2061 = vtanh.pop %v2056
  %v2062 = vld [vmem:[%s2 + $0x60] sm:$0xf]
  %v2063 = vld [vmem:[%s2 + $0x64] sm:$0xf]
  %v2064 = vld [vmem:[%s2 + $0x68] sm:$0xf]
  %v2065 = vld [vmem:[%s2 + $0x6c] sm:$0xf]
  %v2066 = vld [vmem:[%s2 + $0x70] sm:$0xf]
  %v2067 = vld [vmem:[%s2 + $0x74] sm:$0xf]
  %v2068 = vld [vmem:[%s2 + $0x78] sm:$0xf]
  %v2069 = vld [vmem:[%s2 + $0x7c] sm:$0xf]
  %v2070 = vpack.c.bf16 %v2061, %v2061
  %v2079 = vunpack.c.l.b16 %v2062
  %v2080 = vunpack.c.l.b16 %v2063
  %v2081 = vunpack.c.l.b16 %v2064
  %v2082 = vunpack.c.l.b16 %v2065
  %v2083 = vunpack.c.l.b16 %v2066
  %v2084 = vunpack.c.l.b16 %v2067
  %v2085 = vunpack.c.l.b16 %v2068
  %v2086 = vunpack.c.l.b16 %v2069
  %v2087 = vpack.c.b16 %v2080, %v2079
  %v2088 = vpack.c.b16 %v2082, %v2081
  %v2089 = vpack.c.b16 %v2084, %v2083
  %v2090 = vpack.c.b16 %v2086, %v2085
  %v2095 = vrot.slane %v23, 3
  %v2098 = vsel %vm294, %v2070, 0
  %2100 = vmatprep.subr.bf16.mxu0 0
  %2101 = vmatpush1.bf16.msra.mxu0 0
  %2102 = vmatprep.subr.bf16.mxu0 0
  %2103 = vmatpush1.bf16.msra.mxu0 0
  %2104 = vmatprep.subr.bf16.mxu0 0
  %2105 = vmatpush1.bf16.msra.mxu0 0
  %2106 = vmatprep.subr.bf16.mxu0 0
  %2107 = vmatpush1.bf16.msra.mxu0 0
  %2108 = vmatprep.subr.bf16.mxu0 0
  %2109 = vmatpush1.bf16.msra.mxu0 %v2090
  %2110 = vmatprep.subr.bf16.mxu0 0
  %2111 = vmatpush1.bf16.msra.mxu0 %v2089
  %2112 = vmatprep.subr.bf16.mxu0 0
  %2113 = vmatpush1.bf16.msra.mxu0 %v2088
  %2114 = vmatprep.subr.bf16.mxu0 0
  %2115 = vmatpush1.bf16.msra.mxu0 %v2087
  %2116 = vmatprep.subr.bf16.mxu0 0
  %2117 = vmatpush2.bf16.msra.mxu0 0
  %2118 = vmatprep.subr.bf16.mxu0 0
  %2119 = vmatpush2.bf16.msra.mxu0 0
  %2120 = vmatprep.subr.bf16.mxu0 0
  %2121 = vmatpush2.bf16.msra.mxu0 0
  %2122 = vmatprep.subr.bf16.mxu0 0
  %2123 = vmatpush2.bf16.msra.mxu0 0
  %2124 = vmatprep.subr.bf16.mxu0 0
  %2125 = vmatpush2.bf16.msra.mxu0 0
  %2126 = vmatprep.subr.bf16.mxu0 0
  %2127 = vmatpush2.bf16.msra.mxu0 0
  %2128 = vmatprep.subr.bf16.mxu0 0
  %2129 = vmatpush2.bf16.msra.mxu0 0
  %2130 = vmatprep.subr.bf16.mxu0 0
  %2131 = vmatpush2.bf16.msra.mxu0 0
  %2132 = vmatprep.mubr.bf16.mxu0 0
  %2133 = vmatmul.mubr.bf16.gmra.mxu0 %v2098
  %v2134 = vpop.f32.mrf.mxu0
  %v2135 = vadd.f32 %v2095, %v2134
  %v2136 = vpop.f32.mrf.mxu0
  %v2137 = vpop.f32.mrf.mxu0
  %v2138 = vpop.f32.mrf.mxu0
  %2139 = vdwg.mxu0
  %v2140 = vtanh.pop %v2135
  %v2141 = vld [vmem:[%s2 + $0x80] sm:$0xf]
  %v2142 = vld [vmem:[%s2 + $0x84] sm:$0xf]
  %v2143 = vld [vmem:[%s2 + $0x88] sm:$0xf]
  %v2144 = vld [vmem:[%s2 + $0x8c] sm:$0xf]
  %v2145 = vld [vmem:[%s2 + $0x90] sm:$0xf]
  %v2146 = vld [vmem:[%s2 + $0x94] sm:$0xf]
  %v2147 = vld [vmem:[%s2 + $0x98] sm:$0xf]
  %v2148 = vld [vmem:[%s2 + $0x9c] sm:$0xf]
  %v2149 = vpack.c.bf16 %v2140, %v2140
  %v2158 = vunpack.c.l.b16 %v2141
  %v2159 = vunpack.c.l.b16 %v2142
  %v2160 = vunpack.c.l.b16 %v2143
  %v2161 = vunpack.c.l.b16 %v2144
  %v2162 = vunpack.c.l.b16 %v2145
  %v2163 = vunpack.c.l.b16 %v2146
  %v2164 = vunpack.c.l.b16 %v2147
  %v2165 = vunpack.c.l.b16 %v2148
  %v2166 = vpack.c.b16 %v2159, %v2158
  %v2167 = vpack.c.b16 %v2161, %v2160
  %v2168 = vpack.c.b16 %v2163, %v2162
  %v2169 = vpack.c.b16 %v2165, %v2164
  %v2174 = vrot.slane %v23, 4
  %v2177 = vsel %vm294, %v2149, 0
  %2179 = vmatprep.subr.bf16.mxu0 0
  %2180 = vmatpush1.bf16.msra.mxu0 0
  %2181 = vmatprep.subr.bf16.mxu0 0
  %2182 = vmatpush1.bf16.msra.mxu0 0
  %2183 = vmatprep.subr.bf16.mxu0 0
  %2184 = vmatpush1.bf16.msra.mxu0 0
  %2185 = vmatprep.subr.bf16.mxu0 0
  %2186 = vmatpush1.bf16.msra.mxu0 0
  %2187 = vmatprep.subr.bf16.mxu0 0
  %2188 = vmatpush1.bf16.msra.mxu0 %v2169
  %2189 = vmatprep.subr.bf16.mxu0 0
  %2190 = vmatpush1.bf16.msra.mxu0 %v2168
  %2191 = vmatprep.subr.bf16.mxu0 0
  %2192 = vmatpush1.bf16.msra.mxu0 %v2167
  %2193 = vmatprep.subr.bf16.mxu0 0
  %2194 = vmatpush1.bf16.msra.mxu0 %v2166
  %2195 = vmatprep.subr.bf16.mxu0 0
  %2196 = vmatpush2.bf16.msra.mxu0 0
  %2197 = vmatprep.subr.bf16.mxu0 0
  %2198 = vmatpush2.bf16.msra.mxu0 0
  %2199 = vmatprep.subr.bf16.mxu0 0
  %2200 = vmatpush2.bf16.msra.mxu0 0
  %2201 = vmatprep.subr.bf16.mxu0 0
  %2202 = vmatpush2.bf16.msra.mxu0 0
  %2203 = vmatprep.subr.bf16.mxu0 0
  %2204 = vmatpush2.bf16.msra.mxu0 0
  %2205 = vmatprep.subr.bf16.mxu0 0
  %2206 = vmatpush2.bf16.msra.mxu0 0
  %2207 = vmatprep.subr.bf16.mxu0 0
  %2208 = vmatpush2.bf16.msra.mxu0 0
  %2209 = vmatprep.subr.bf16.mxu0 0
  %2210 = vmatpush2.bf16.msra.mxu0 0
  %2211 = vmatprep.mubr.bf16.mxu0 0
  %2212 = vmatmul.mubr.bf16.gmra.mxu0 %v2177
  %v2213 = vpop.f32.mrf.mxu0
  %v2214 = vadd.f32 %v2174, %v2213
  %v2215 = vpop.f32.mrf.mxu0
  %v2216 = vpop.f32.mrf.mxu0
  %v2217 = vpop.f32.mrf.mxu0
  %2218 = vdwg.mxu0
  %v2219 = vtanh.pop %v2214
  %v2220 = vld [vmem:[%s2 + $0xa0] sm:$0xf]
  %v2221 = vld [vmem:[%s2 + $0xa4] sm:$0xf]
  %v2222 = vld [vmem:[%s2 + $0xa8] sm:$0xf]
  %v2223 = vld [vmem:[%s2 + $0xac] sm:$0xf]
  %v2224 = vld [vmem:[%s2 + $0xb0] sm:$0xf]
  %v2225 = vld [vmem:[%s2 + $0xb4] sm:$0xf]
  %v2226 = vld [vmem:[%s2 + $0xb8] sm:$0xf]
  %v2227 = vld [vmem:[%s2 + $0xbc] sm:$0xf]
  %v2228 = vpack.c.bf16 %v2219, %v2219
  %v2237 = vunpack.c.l.b16 %v2220
  %v2238 = vunpack.c.l.b16 %v2221
  %v2239 = vunpack.c.l.b16 %v2222
  %v2240 = vunpack.c.l.b16 %v2223
  %v2241 = vunpack.c.l.b16 %v2224
  %v2242 = vunpack.c.l.b16 %v2225
  %v2243 = vunpack.c.l.b16 %v2226
  %v2244 = vunpack.c.l.b16 %v2227
  %v2245 = vpack.c.b16 %v2238, %v2237
  %v2246 = vpack.c.b16 %v2240, %v2239
  %v2247 = vpack.c.b16 %v2242, %v2241
  %v2248 = vpack.c.b16 %v2244, %v2243
  %v2253 = vrot.slane %v23, 5
  %v2256 = vsel %vm294, %v2228, 0
  %2258 = vmatprep.subr.bf16.mxu0 0
  %2259 = vmatpush1.bf16.msra.mxu0 0
  %2260 = vmatprep.subr.bf16.mxu0 0
  %2261 = vmatpush1.bf16.msra.mxu0 0
  %2262 = vmatprep.subr.bf16.mxu0 0
  %2263 = vmatpush1.bf16.msra.mxu0 0
  %2264 = vmatprep.subr.bf16.mxu0 0
  %2265 = vmatpush1.bf16.msra.mxu0 0
  %2266 = vmatprep.subr.bf16.mxu0 0
  %2267 = vmatpush1.bf16.msra.mxu0 %v2248
  %2268 = vmatprep.subr.bf16.mxu0 0
  %2269 = vmatpush1.bf16.msra.mxu0 %v2247
  %2270 = vmatprep.subr.bf16.mxu0 0
  %2271 = vmatpush1.bf16.msra.mxu0 %v2246
  %2272 = vmatprep.subr.bf16.mxu0 0
  %2273 = vmatpush1.bf16.msra.mxu0 %v2245
  %2274 = vmatprep.subr.bf16.mxu0 0
  %2275 = vmatpush2.bf16.msra.mxu0 0
  %2276 = vmatprep.subr.bf16.mxu0 0
  %2277 = vmatpush2.bf16.msra.mxu0 0
  %2278 = vmatprep.subr.bf16.mxu0 0
  %2279 = vmatpush2.bf16.msra.mxu0 0
  %2280 = vmatprep.subr.bf16.mxu0 0
  %2281 = vmatpush2.bf16.msra.mxu0 0
  %2282 = vmatprep.subr.bf16.mxu0 0
  %2283 = vmatpush2.bf16.msra.mxu0 0
  %2284 = vmatprep.subr.bf16.mxu0 0
  %2285 = vmatpush2.bf16.msra.mxu0 0
  %2286 = vmatprep.subr.bf16.mxu0 0
  %2287 = vmatpush2.bf16.msra.mxu0 0
  %2288 = vmatprep.subr.bf16.mxu0 0
  %2289 = vmatpush2.bf16.msra.mxu0 0
  %2290 = vmatprep.mubr.bf16.mxu0 0
  %2291 = vmatmul.mubr.bf16.gmra.mxu0 %v2256
  %v2292 = vpop.f32.mrf.mxu0
  %v2293 = vadd.f32 %v2253, %v2292
  %v2294 = vpop.f32.mrf.mxu0
  %v2295 = vpop.f32.mrf.mxu0
  %v2296 = vpop.f32.mrf.mxu0
  %2297 = vdwg.mxu0
  %v2298 = vtanh.pop %v2293
  %v2299 = vld [vmem:[%s2 + $0xc0] sm:$0xf]
  %v2300 = vld [vmem:[%s2 + $0xc4] sm:$0xf]
  %v2301 = vld [vmem:[%s2 + $0xc8] sm:$0xf]
  %v2302 = vld [vmem:[%s2 + $0xcc] sm:$0xf]
  %v2303 = vld [vmem:[%s2 + $0xd0] sm:$0xf]
  %v2304 = vld [vmem:[%s2 + $0xd4] sm:$0xf]
  %v2305 = vld [vmem:[%s2 + $0xd8] sm:$0xf]
  %v2306 = vld [vmem:[%s2 + $0xdc] sm:$0xf]
  %v2307 = vpack.c.bf16 %v2298, %v2298
  %v2316 = vunpack.c.l.b16 %v2299
  %v2317 = vunpack.c.l.b16 %v2300
  %v2318 = vunpack.c.l.b16 %v2301
  %v2319 = vunpack.c.l.b16 %v2302
  %v2320 = vunpack.c.l.b16 %v2303
  %v2321 = vunpack.c.l.b16 %v2304
  %v2322 = vunpack.c.l.b16 %v2305
  %v2323 = vunpack.c.l.b16 %v2306
  %v2324 = vpack.c.b16 %v2317, %v2316
  %v2325 = vpack.c.b16 %v2319, %v2318
  %v2326 = vpack.c.b16 %v2321, %v2320
  %v2327 = vpack.c.b16 %v2323, %v2322
  %v2332 = vrot.slane %v23, 6
  %v2335 = vsel %vm294, %v2307, 0
  %2337 = vmatprep.subr.bf16.mxu0 0
  %2338 = vmatpush1.bf16.msra.mxu0 0
  %2339 = vmatprep.subr.bf16.mxu0 0
  %2340 = vmatpush1.bf16.msra.mxu0 0
  %2341 = vmatprep.subr.bf16.mxu0 0
  %2342 = vmatpush1.bf16.msra.mxu0 0
  %2343 = vmatprep.subr.bf16.mxu0 0
  %2344 = vmatpush1.bf16.msra.mxu0 0
  %2345 = vmatprep.subr.bf16.mxu0 0
  %2346 = vmatpush1.bf16.msra.mxu0 %v2327
  %2347 = vmatprep.subr.bf16.mxu0 0
  %2348 = vmatpush1.bf16.msra.mxu0 %v2326
  %2349 = vmatprep.subr.bf16.mxu0 0
  %2350 = vmatpush1.bf16.msra.mxu0 %v2325
  %2351 = vmatprep.subr.bf16.mxu0 0
  %2352 = vmatpush1.bf16.msra.mxu0 %v2324
  %2353 = vmatprep.subr.bf16.mxu0 0
  %2354 = vmatpush2.bf16.msra.mxu0 0
  %2355 = vmatprep.subr.bf16.mxu0 0
  %2356 = vmatpush2.bf16.msra.mxu0 0
  %2357 = vmatprep.subr.bf16.mxu0 0
  %2358 = vmatpush2.bf16.msra.mxu0 0
  %2359 = vmatprep.subr.bf16.mxu0 0
  %2360 = vmatpush2.bf16.msra.mxu0 0
  %2361 = vmatprep.subr.bf16.mxu0 0
  %2362 = vmatpush2.bf16.msra.mxu0 0
  %2363 = vmatprep.subr.bf16.mxu0 0
  %2364 = vmatpush2.bf16.msra.mxu0 0
  %2365 = vmatprep.subr.bf16.mxu0 0
  %2366 = vmatpush2.bf16.msra.mxu0 0
  %2367 = vmatprep.subr.bf16.mxu0 0
  %2368 = vmatpush2.bf16.msra.mxu0 0
  %2369 = vmatprep.mubr.bf16.mxu0 0
  %2370 = vmatmul.mubr.bf16.gmra.mxu0 %v2335
  %v2371 = vpop.f32.mrf.mxu0
  %v2372 = vadd.f32 %v2332, %v2371
  %v2373 = vpop.f32.mrf.mxu0
  %v2374 = vpop.f32.mrf.mxu0
  %v2375 = vpop.f32.mrf.mxu0
  %2376 = vdwg.mxu0
  %vm2377 = vcmask 516096
  %2378 = vst.msk [vmem:[%s4] sm:$0x1] %vm2377, %v2372
  // Predicated region
  $region18: #{point_clouds_nn.1} parent=0 // pred_check
    _
  $region19: #{point_clouds_nn.1} parent=0 // pred_check_branch
    %2380 = sbr.rel (0) target = $region21
  $region20: #{point_clouds_nn.1} parent=0 // pred_region
    _
  $region21: #{point_clouds_nn.1} parent=0 // pred_fallthru
    _
  // Predicated region
  $region22: #{point_clouds_nn.1} parent=0 // pred_check
    _
  $region23: #{point_clouds_nn.1} parent=0 // pred_check_branch
    %2382 = sbr.rel (0) target = $region25
  $region24: #{point_clouds_nn.1} parent=0 // pred_region
    _
  $region25: #{point_clouds_nn.1} parent=0 // pred_fallthru
    _

</llo_original>
